<compile_context>
chip_gen: v7x
topology: tpu7x:2x2x1
jax: 0.10.0
libtpu: 0.0.40
codegen_flags: <defaults>
</compile_context>

<pallas_src>
import functools
import math

import jax
import jax.numpy as jnp
from jax import lax
from jax.experimental import pallas as pl
from jax.experimental.pallas import tpu as pltpu

_BN_EPS = 1e-5
_OFF = 8   # sublane-aligned interior offset of the activation scratch


def _round_up(n, m):
    return (n + m - 1) // m * m


def _conv_block_kernel(x_ref, w_ref, b_ref, g_ref, be_ref,
                       temb_ref, tw_ref, tb_ref, s_ref, st_ref,
                       out_ref, act_ref, *, W, off):
    """One ConvBlock layer per grid step (grid = (block_size,), "arbitrary").

    x_ref:    (B, H, WCp)     f32  width/channel-folded input (read at l == 0)
    w_ref:    (3, WCp, WCp)   bf16 block-Toeplitz conv weight of this layer
    b_ref:    (1, WCp)        f32  conv bias, lane-replicated
    g_ref:    (1, CS)         f32  BN gamma (per channel slot)
    be_ref:   (1, CS)         f32  BN beta
    temb_ref: (B, T)          f32  time embedding
    tw_ref:   (T, WCp) bf16 / tb_ref: (1, WCp) f32  lane-replicated Linear
    s_ref:    (WCp, CS)       f32  channel-gather matrix (lane -> channel)
    st_ref:   (CS, WCp)       f32  its transpose (channel -> lane)
    out_ref:  (B, H, WCp)     f32  lane-dense output slab (written on last step)
    act_ref:  (B, HP, WCp)    f32  VMEM-resident activation, zero halo rows
    """
    l = pl.program_id(0)
    num_l = pl.num_programs(0)
    B, H, WCp = x_ref.shape
    HP = act_ref.shape[1]
    n = B * H
    inv_cnt = 1.0 / float(B * H * W)      # BN count = N*H*W

    @pl.when(l == 0)
    def _init():
        # Zero only the halo strips (8-row aligned -> unmasked stores); the
        # interior rows [off, off+H) are fully overwritten by the input.
        act_ref[:, :off, :] = jnp.zeros((B, off, WCp), jnp.float32)
        act_ref[:, off + H:, :] = jnp.zeros((B, HP - off - H, WCp), jnp.float32)
        act_ref[:, off:off + H, :] = x_ref[...]

    # 3x3 SAME conv: 3 dy-accumulated matmuls against block-Toeplitz weights
    # (dx shifts + channel contraction live in the lane axis).  bf16 operands,
    # f32 accumulation.
    acc = jnp.zeros((n, WCp), jnp.float32)
    for dy in range(3):
        lhs = act_ref[:, off + dy - 1:off + dy - 1 + H, :].reshape(n, WCp)
        acc += jnp.dot(lhs.astype(jnp.bfloat16), w_ref[dy],
                       preferred_element_type=jnp.float32)
    acc += b_ref[...]                                          # (1, WCp) bcast
    # (The conv bias cancels under training-mode BN; kept for faithfulness.)

    # BatchNorm2d, training-mode batch stats, single pass, sums kept in f32.
    # Per-channel reduce over the W lane groups / broadcast back via the tiny
    # channel-gather matmuls S / S^T (MXU) instead of cross-lane reshapes.
    s1 = jnp.sum(acc, axis=0, keepdims=True)                   # (1, WCp)
    s2 = jnp.sum(acc * acc, axis=0, keepdims=True)             # (1, WCp)
    stats = jnp.concatenate([s1, s2], axis=0)                  # (2, WCp)
    ch = jnp.dot(stats, s_ref[...],
                 preferred_element_type=jnp.float32) * inv_cnt  # (2, CS)
    mean_c = ch[0:1]
    var_c = jnp.maximum(ch[1:2] - mean_c * mean_c, 0.0)        # biased variance
    scale_c = g_ref[...] * lax.rsqrt(var_c + _BN_EPS)          # (1, CS)
    shift_c = be_ref[...] - mean_c * scale_c
    sl = jnp.dot(jnp.concatenate([scale_c, shift_c], axis=0), st_ref[...],
                 preferred_element_type=jnp.float32)           # (2, WCp)
    y = jnp.maximum(acc * sl[0:1] + sl[1:2], 0.0)              # BN + ReLU
    # Dropout(p=0.0) is the identity.
    # TODO(synk): dropout with p > 0 (pltpu.prng_* mask) not implemented.

    # first_conv(x) + time-emb Linear (lane-replicated), first layer only.
    t = jnp.dot(temb_ref[...].astype(jnp.bfloat16), tw_ref[...],
                preferred_element_type=jnp.float32) + tb_ref[...]   # (B, WCp)
    y = y.reshape(B, H, WCp) + jnp.where(l == 0, 1.0, 0.0) * t[:, None, :]

    @pl.when(l + 1 < num_l)
    def _writeback():
        act_ref[:, off:off + H, :] = y     # stays VMEM-resident for layer l+1

    @pl.when(l + 1 == num_l)
    def _emit():
        out_ref[...] = y


def pack_params(params, width):
    """One-time repack of ConvBlock params into the kernel's folded layout."""
    layers = params["layers"]
    c_out = layers[0][0].shape[-1]                  # `channels`
    c_in0 = layers[0][0].shape[-2]                  # `start_channels`
    cs = max(c_in0, c_out)                          # channel slots per x position
    wc = width * cs
    wcp = _round_up(wc, 128)                        # dense lane axis
    xs = jnp.arange(width)

    def toeplitz(w):                                # (3,3,cin,cout) -> (3,WCp,WCp)
        cin, cout = w.shape[2], w.shape[3]
        tb = jnp.zeros((3, width, cs, width, cs), jnp.float32)
        for dx in range(3):
            band = (xs[:, None] == xs[None, :] + (dx - 1)).astype(jnp.float32)
            blk = jnp.zeros((3, cs, cs), jnp.float32).at[:, :cin, :cout].set(
                w[:, dx].astype(jnp.float32))
            tb = tb + band[None, :, None, :, None] * blk[:, None, :, None, :]
        t = tb.reshape(3, wc, wc)
        return jnp.pad(t, ((0, 0), (0, wcp - wc), (0, wcp - wc)))

    def lane_vec(v):                                # (1, c_out) -> (1, WCp)
        z = jnp.zeros((1, width, cs), jnp.float32).at[:, :, :c_out].set(
            jnp.broadcast_to(v.astype(jnp.float32).reshape(1, 1, c_out),
                             (1, width, c_out)))
        return jnp.pad(z.reshape(1, wc), ((0, 0), (0, wcp - wc)))

    def chan_vec(v):                                # (1, c_out) -> (1, CS)
        return jnp.pad(v.astype(jnp.float32), ((0, 0), (0, cs - c_out)))

    w_all = jnp.stack([toeplitz(w) for (w, _, _, _) in layers]
                      ).astype(jnp.bfloat16)                     # (L,3,WCp,WCp)
    b_all = jnp.stack([lane_vec(b) for (_, b, _, _) in layers])  # (L,1,WCp)
    g_all = jnp.stack([chan_vec(g) for (_, _, g, _) in layers])  # (L,1,CS)
    be_all = jnp.stack([chan_vec(be) for (_, _, _, be) in layers])

    t_dim = params["time_w"].shape[0]
    twl = jnp.zeros((t_dim, width, cs), jnp.float32).at[:, :, :c_out].set(
        jnp.broadcast_to(params["time_w"].astype(jnp.float32)[:, None, :],
                         (t_dim, width, c_out)))
    tw_lane = jnp.pad(twl.reshape(t_dim, wc),
                      ((0, 0), (0, wcp - wc))).astype(jnp.bfloat16)
    tb_lane = lane_vec(params["time_b"])

    s = jnp.pad(jnp.tile(jnp.eye(cs, dtype=jnp.float32), (width, 1)),
                ((0, wcp - wc), (0, 0)))                         # (WCp, CS)
    return {"w": w_all, "b": b_all, "g": g_all, "be": be_all,
            "tw": tw_lane, "tb": tb_lane, "s": s, "st": s.T}


@functools.partial(jax.jit, static_argnames=("channels",))
def conv_block_forward(x_nchw, time_emb, packed, *, channels):
    """Pallas ConvBlock.forward. x_nchw: (B, C0, H, W); returns NCHW."""
    B, C0, H, W = x_nchw.shape
    wcp, cs = packed["s"].shape
    wc = W * cs
    L = packed["w"].shape[0]
    T = packed["tw"].shape[0]
    hp = _OFF + _round_up(H + 1, 8)      # interior rows [_OFF, _OFF+H), zero halo below

    # NCHW -> (B, H, WCp): fold width and channel into the lane axis.
    xf = jnp.transpose(x_nchw, (0, 2, 3, 1)).astype(jnp.float32)
    xf = jnp.pad(xf, ((0, 0), (0, 0), (0, 0), (0, cs - C0)))
    xf = jnp.pad(xf.reshape(B, H, wc), ((0, 0), (0, 0), (0, wcp - wc)))

    kernel = functools.partial(_conv_block_kernel, W=W, off=_OFF)
    grid_spec = pltpu.PrefetchScalarGridSpec(
        num_scalar_prefetch=0,
        grid=(L,),                                                # one layer / step
        in_specs=[
            pl.BlockSpec((B, H, wcp), lambda l: (0, 0, 0)),            # x
            pl.BlockSpec((None, 3, wcp, wcp), lambda l: (l, 0, 0, 0)),  # conv W (bf16)
            pl.BlockSpec((None, 1, wcp), lambda l: (l, 0, 0)),         # conv bias
            pl.BlockSpec((None, 1, cs), lambda l: (l, 0, 0)),          # BN gamma
            pl.BlockSpec((None, 1, cs), lambda l: (l, 0, 0)),          # BN beta
            pl.BlockSpec((B, T), lambda l: (0, 0)),                    # time emb
            pl.BlockSpec((T, wcp), lambda l: (0, 0)),                  # time W (bf16)
            pl.BlockSpec((1, wcp), lambda l: (0, 0)),                  # time b
            pl.BlockSpec((wcp, cs), lambda l: (0, 0)),                 # S
            pl.BlockSpec((cs, wcp), lambda l: (0, 0)),                 # S^T
        ],
        out_specs=pl.BlockSpec((B, H, wcp), lambda l: (0, 0, 0)),
        scratch_shapes=[pltpu.VMEM((B, hp, wcp), jnp.float32)],
    )
    y = pl.pallas_call(
        kernel,
        out_shape=jax.ShapeDtypeStruct((B, H, wcp), jnp.float32),
        grid_spec=grid_spec,
        compiler_params=pltpu.CompilerParams(
            dimension_semantics=("arbitrary",),      # layers are sequential
            vmem_limit_bytes=32 * 1024 * 1024),      # explicit (v5e default 16 MiB);
                                                     # well under v7x's 64 MiB VMEM
    )(xf, packed["w"], packed["b"], packed["g"], packed["be"],
      time_emb.astype(jnp.float32), packed["tw"], packed["tb"],
      packed["s"], packed["st"])

    # Lane-dense slab -> NCHW (layout plumbing stays in the XLA wrapper).
    y = y[..., :wc].reshape(B, H, W, cs)[..., :channels]
    return jnp.transpose(y, (0, 3, 1, 2))


def init_params(key, start_channels, channels, block_size, time_embed_dim):
    """Deterministic parameter init (torch-like uniform bounds)."""
    keys = jax.random.split(key, 2 * block_size + 2)
    layers = []
    cin = start_channels
    for i in range(block_size):
        bound = 1.0 / math.sqrt(cin * 9)
        w = jax.random.uniform(keys[2 * i], (3, 3, cin, channels),
                               jnp.float32, -bound, bound)       # HWIO
        b = jax.random.uniform(keys[2 * i + 1], (1, channels),
                               jnp.float32, -bound, bound)
        g = jnp.ones((1, channels), jnp.float32)                 # BN gamma
        be = jnp.zeros((1, channels), jnp.float32)               # BN beta
        layers.append((w, b, g, be))
        cin = channels
    bound = 1.0 / math.sqrt(time_embed_dim)
    tw = jax.random.uniform(keys[-2], (time_embed_dim, channels),
                            jnp.float32, -bound, bound)
    tb = jax.random.uniform(keys[-1], (1, channels), jnp.float32, -bound, bound)
    return {"layers": layers, "time_w": tw, "time_b": tb}


def reference_forward(x_nchw, time_emb, params):
    """Pure-JAX f32 reference (matches the torch forward semantics)."""
    x = jnp.transpose(x_nchw, (0, 2, 3, 1)).astype(jnp.float32)

    def cbr(x, w, b, g, be):
        y = lax.conv_general_dilated(
            x, w, (1, 1), "SAME",
            dimension_numbers=("NHWC", "HWIO", "NHWC"),
            precision=lax.Precision.HIGHEST) + b.reshape(1, 1, 1, -1)
        mean = jnp.mean(y, axis=(0, 1, 2), keepdims=True)
        var = jnp.mean((y - mean) ** 2, axis=(0, 1, 2), keepdims=True)
        y = (y - mean) / jnp.sqrt(var + _BN_EPS)
        y = g.reshape(1, 1, 1, -1) * y + be.reshape(1, 1, 1, -1)
        return jnp.maximum(y, 0.0)

    w, b, g, be = params["layers"][0]
    x = cbr(x, w, b, g, be)
    t = time_emb.astype(jnp.float32) @ params["time_w"] + params["time_b"]
    x = x + t.reshape(t.shape[0], 1, 1, -1)
    for (w, b, g, be) in params["layers"][1:]:
        x = cbr(x, w, b, g, be)
    return jnp.transpose(x, (0, 3, 1, 2))


if __name__ == "__main__":
    start_channels, channels, block_size, time_embed_dim = 4, 8, 2, 6
    B, H, W = 2, 16, 16

    key = jax.random.PRNGKey(0)
    kx, kt, kp = jax.random.split(key, 3)
    x = jax.random.normal(kx, (B, start_channels, H, W), jnp.float32)
    time_emb = jax.random.normal(kt, (B, time_embed_dim), jnp.float32)
    params = init_params(kp, start_channels, channels, block_size, time_embed_dim)

    packed = pack_params(params, W)          # one-time layout repack (outside jit)
    out = conv_block_forward(x, time_emb, packed, channels=channels)
    out = jax.block_until_ready(out)

    assert out.shape == (B, channels, H, W), out.shape
    ref = reference_forward(x, time_emb, params)
    # bf16 MXU operands (f32 accumulation) give ~1e-2-level drift vs the
    # f32/HIGHEST reference; structural/packing bugs would be O(1).
    err = float(jnp.max(jnp.abs(out - ref)))
    assert jnp.allclose(out, ref, atol=5e-2, rtol=5e-2), err
    print("KERNEL_OK")
</pallas_src>

<mosaic_0001>
module attributes {stable_mosaic.version = 11 : i64} {
  func.func @_conv_block_kernel(%arg0: i32, %arg1: memref<2x16x128xf32, #tpu.memory_space<vmem>>, %arg2: memref<1x3x128x128xbf16, #tpu.memory_space<vmem>>, %arg3: memref<1x1x128xf32, #tpu.memory_space<vmem>>, %arg4: memref<1x1x8xf32, #tpu.memory_space<vmem>>, %arg5: memref<1x1x8xf32, #tpu.memory_space<vmem>>, %arg6: memref<2x6xf32, #tpu.memory_space<vmem>>, %arg7: memref<6x128xbf16, #tpu.memory_space<vmem>>, %arg8: memref<1x128xf32, #tpu.memory_space<vmem>>, %arg9: memref<128x8xf32, #tpu.memory_space<vmem>>, %arg10: memref<8x128xf32, #tpu.memory_space<vmem>>, %arg11: memref<2x16x128xf32, #tpu.memory_space<vmem>>, %arg12: memref<2x32x128xf32, #tpu.memory_space<vmem>>) attributes {dimension_semantics = [#tpu.dimension_semantics<arbitrary>], iteration_bounds = array<i64: 2>, scalar_prefetch = 0 : i64, scratch_operands = 1 : i64, tpu.core_type = #tpu.core_type<tc>, window_params = [{pipeline_mode = #tpu.pipeline_mode<synchronous>, transform_indices = @transform_0, window_bounds = array<i64: 2, 16, 128>}, {transform_indices = @transform_1, window_bounds = array<i64: 1, 3, 128, 128>}, {transform_indices = @transform_2, window_bounds = array<i64: 1, 1, 128>}, {transform_indices = @transform_3, window_bounds = array<i64: 1, 1, 8>}, {transform_indices = @transform_4, window_bounds = array<i64: 1, 1, 8>}, {pipeline_mode = #tpu.pipeline_mode<synchronous>, transform_indices = @transform_5, window_bounds = array<i64: 2, 6>}, {pipeline_mode = #tpu.pipeline_mode<synchronous>, transform_indices = @transform_6, window_bounds = array<i64: 6, 128>}, {pipeline_mode = #tpu.pipeline_mode<synchronous>, transform_indices = @transform_7, window_bounds = array<i64: 1, 128>}, {pipeline_mode = #tpu.pipeline_mode<synchronous>, transform_indices = @transform_8, window_bounds = array<i64: 128, 8>}, {pipeline_mode = #tpu.pipeline_mode<synchronous>, transform_indices = @transform_9, window_bounds = array<i64: 8, 128>}, {pipeline_mode = #tpu.pipeline_mode<synchronous>, transform_indices = @transform_10, window_bounds = array<i64: 2, 16, 128>}]} {
    %c0_i32 = arith.constant 0 : i32
    %0 = arith.cmpi eq, %arg0, %c0_i32 : i32
    %1 = arith.extui %0 : i1 to i32
    %c0_i32_0 = arith.constant 0 : i32
    %2 = arith.cmpi ne, %1, %c0_i32_0 : i32
    scf.if %2 {
      %cst_54 = arith.constant 0.000000e+00 : f32
      %89 = vector.broadcast %cst_54 : f32 to vector<2x8x128xf32>
      %c0_55 = arith.constant 0 : index
      %c0_56 = arith.constant 0 : index
      %c0_57 = arith.constant 0 : index
      %90 = vector.load %arg12[%c0_55, %c0_56, %c0_57] : memref<2x32x128xf32, #tpu.memory_space<vmem>>, vector<2x8x128xf32>
      tpu.vector_store %arg12[%c0_55, %c0_56, %c0_57], %89 {strides = array<i32>} : memref<2x32x128xf32, #tpu.memory_space<vmem>>, vector<2x8x128xf32>,
      %cst_58 = arith.constant 0.000000e+00 : f32
      %91 = vector.broadcast %cst_58 : f32 to vector<2x8x128xf32>
      %c0_59 = arith.constant 0 : index
      %c24 = arith.constant 24 : index
      %c0_60 = arith.constant 0 : index
      %92 = vector.load %arg12[%c0_59, %c24, %c0_60] : memref<2x32x128xf32, #tpu.memory_space<vmem>>, vector<2x8x128xf32>
      tpu.vector_store %arg12[%c0_59, %c24, %c0_60], %91 {strides = array<i32>} : memref<2x32x128xf32, #tpu.memory_space<vmem>>, vector<2x8x128xf32>,
      %c0_61 = arith.constant 0 : index
      %c0_62 = arith.constant 0 : index
      %c0_63 = arith.constant 0 : index
      %93 = vector.load %arg1[%c0_61, %c0_62, %c0_63] : memref<2x16x128xf32, #tpu.memory_space<vmem>>, vector<2x16x128xf32>
      %c0_64 = arith.constant 0 : index
      %c8_65 = arith.constant 8 : index
      %c0_66 = arith.constant 0 : index
      %94 = vector.load %arg12[%c0_64, %c8_65, %c0_66] : memref<2x32x128xf32, #tpu.memory_space<vmem>>, vector<2x16x128xf32>
      tpu.vector_store %arg12[%c0_64, %c8_65, %c0_66], %93 {strides = array<i32>} : memref<2x32x128xf32, #tpu.memory_space<vmem>>, vector<2x16x128xf32>,
    } else {
    }
    %cst = arith.constant 0.000000e+00 : f32
    %3 = vector.broadcast %cst : f32 to vector<32x128xf32>
    %c0 = arith.constant 0 : index
    %c7 = arith.constant 7 : index
    %c0_1 = arith.constant 0 : index
    %4 = vector.load %arg12[%c0, %c7, %c0_1] : memref<2x32x128xf32, #tpu.memory_space<vmem>>, vector<2x16x128xf32>
    %5 = vector.shape_cast %4 : vector<2x16x128xf32> to vector<32x128xf32>
    %6 = arith.truncf %5 : vector<32x128xf32> to vector<32x128xbf16>
    %c0_2 = arith.constant 0 : index
    %c0_3 = arith.constant 0 : index
    %c0_4 = arith.constant 0 : index
    %c0_5 = arith.constant 0 : index
    %7 = vector.load %arg2[%c0_2, %c0_3, %c0_4, %c0_5] : memref<1x3x128x128xbf16, #tpu.memory_space<vmem>>, vector<1x1x128x128xbf16>
    %8 = vector.shape_cast %7 : vector<1x1x128x128xbf16> to vector<128x128xbf16>
    %cst_6 = arith.constant dense<0.000000e+00> : vector<32x128xf32>
    %9 = tpu.matmul %6, %8, %cst_6 {dimension_numbers = #tpu.dot_dimension_numbers<[1], [0], [0], [1], [0, 0, 1, 1], [], []>} : vector<32x128xbf16>, vector<128x128xbf16>, vector<32x128xf32> -> vector<32x128xf32>
    %10 = arith.addf %3, %9 : vector<32x128xf32>
    %c0_7 = arith.constant 0 : index
    %c8 = arith.constant 8 : index
    %c0_8 = arith.constant 0 : index
    %11 = vector.load %arg12[%c0_7, %c8, %c0_8] : memref<2x32x128xf32, #tpu.memory_space<vmem>>, vector<2x16x128xf32>
    %12 = vector.shape_cast %11 : vector<2x16x128xf32> to vector<32x128xf32>
    %13 = arith.truncf %12 : vector<32x128xf32> to vector<32x128xbf16>
    %c0_9 = arith.constant 0 : index
    %c1 = arith.constant 1 : index
    %c0_10 = arith.constant 0 : index
    %c0_11 = arith.constant 0 : index
    %14 = vector.load %arg2[%c0_9, %c1, %c0_10, %c0_11] : memref<1x3x128x128xbf16, #tpu.memory_space<vmem>>, vector<1x1x128x128xbf16>
    %15 = vector.shape_cast %14 : vector<1x1x128x128xbf16> to vector<128x128xbf16>
    %cst_12 = arith.constant dense<0.000000e+00> : vector<32x128xf32>
    %16 = tpu.matmul %13, %15, %cst_12 {dimension_numbers = #tpu.dot_dimension_numbers<[1], [0], [0], [1], [0, 0, 1, 1], [], []>} : vector<32x128xbf16>, vector<128x128xbf16>, vector<32x128xf32> -> vector<32x128xf32>
    %17 = arith.addf %10, %16 : vector<32x128xf32>
    %c0_13 = arith.constant 0 : index
    %c9 = arith.constant 9 : index
    %c0_14 = arith.constant 0 : index
    %18 = vector.load %arg12[%c0_13, %c9, %c0_14] : memref<2x32x128xf32, #tpu.memory_space<vmem>>, vector<2x16x128xf32>
    %19 = vector.shape_cast %18 : vector<2x16x128xf32> to vector<32x128xf32>
    %20 = arith.truncf %19 : vector<32x128xf32> to vector<32x128xbf16>
    %c0_15 = arith.constant 0 : index
    %c2 = arith.constant 2 : index
    %c0_16 = arith.constant 0 : index
    %c0_17 = arith.constant 0 : index
    %21 = vector.load %arg2[%c0_15, %c2, %c0_16, %c0_17] : memref<1x3x128x128xbf16, #tpu.memory_space<vmem>>, vector<1x1x128x128xbf16>
    %22 = vector.shape_cast %21 : vector<1x1x128x128xbf16> to vector<128x128xbf16>
    %cst_18 = arith.constant dense<0.000000e+00> : vector<32x128xf32>
    %23 = tpu.matmul %20, %22, %cst_18 {dimension_numbers = #tpu.dot_dimension_numbers<[1], [0], [0], [1], [0, 0, 1, 1], [], []>} : vector<32x128xbf16>, vector<128x128xbf16>, vector<32x128xf32> -> vector<32x128xf32>
    %24 = arith.addf %17, %23 : vector<32x128xf32>
    %c0_19 = arith.constant 0 : index
    %c0_20 = arith.constant 0 : index
    %c0_21 = arith.constant 0 : index
    %25 = vector.load %arg3[%c0_19, %c0_20, %c0_21] : memref<1x1x128xf32, #tpu.memory_space<vmem>>, vector<1x1x128xf32>
    %26 = vector.shape_cast %25 : vector<1x1x128xf32> to vector<1x128xf32>
    %27 = vector.broadcast %26 : vector<1x128xf32> to vector<32x128xf32>
    %28 = arith.addf %24, %27 : vector<32x128xf32>
    %cst_22 = arith.constant dense<0.000000e+00> : vector<128xf32>
    %29 = vector.multi_reduction <add>, %28, %cst_22 [0] : vector<32x128xf32> to vector<128xf32>
    %30 = vector.shape_cast %29 : vector<128xf32> to vector<1x128xf32>
    %31 = arith.mulf %28, %28 : vector<32x128xf32>
    %cst_23 = arith.constant dense<0.000000e+00> : vector<128xf32>
    %32 = vector.multi_reduction <add>, %31, %cst_23 [0] : vector<32x128xf32> to vector<128xf32>
    %33 = vector.shape_cast %32 : vector<128xf32> to vector<1x128xf32>
    %34 = tpu.concatenate %30, %33 in 0 : vector<1x128xf32>, vector<1x128xf32> -> vector<2x128xf32>
    %c0_24 = arith.constant 0 : index
    %c0_25 = arith.constant 0 : index
    %35 = vector.load %arg9[%c0_24, %c0_25] : memref<128x8xf32, #tpu.memory_space<vmem>>, vector<128x8xf32>
    %cst_26 = arith.constant dense<0.000000e+00> : vector<2x8xf32>
    %36 = tpu.matmul %34, %35, %cst_26 {dimension_numbers = #tpu.dot_dimension_numbers<[1], [0], [0], [1], [0, 0, 1, 1], [], []>} : vector<2x128xf32>, vector<128x8xf32>, vector<2x8xf32> -> vector<2x8xf32>
    %cst_27 = arith.constant 0.001953125 : f32
    %37 = vector.broadcast %cst_27 : f32 to vector<2x8xf32>
    %38 = arith.mulf %36, %37 : vector<2x8xf32>
    %39 = vector.extract_strided_slice %38 {offsets = [0, 0], sizes = [1, 8], strides = [1, 1]} : vector<2x8xf32> to vector<1x8xf32>
    %40 = vector.extract_strided_slice %38 {offsets = [1, 0], sizes = [1, 8], strides = [1, 1]} : vector<2x8xf32> to vector<1x8xf32>
    %41 = arith.mulf %39, %39 : vector<1x8xf32>
    %42 = arith.subf %40, %41 : vector<1x8xf32>
    %cst_28 = arith.constant 0.000000e+00 : f32
    %43 = vector.broadcast %cst_28 : f32 to vector<1x8xf32>
    %44 = arith.maximumf %42, %43 : vector<1x8xf32>
    %c0_29 = arith.constant 0 : index
    %c0_30 = arith.constant 0 : index
    %c0_31 = arith.constant 0 : index
    %45 = vector.load %arg4[%c0_29, %c0_30, %c0_31] : memref<1x1x8xf32, #tpu.memory_space<vmem>>, vector<1x1x8xf32>
    %46 = vector.shape_cast %45 : vector<1x1x8xf32> to vector<1x8xf32>
    %cst_32 = arith.constant 9.99999974E-6 : f32
    %47 = vector.broadcast %cst_32 : f32 to vector<1x8xf32>
    %48 = arith.addf %44, %47 : vector<1x8xf32>
    %49 = math.rsqrt %48 : vector<1x8xf32>
    %50 = arith.mulf %46, %49 : vector<1x8xf32>
    %c0_33 = arith.constant 0 : index
    %c0_34 = arith.constant 0 : index
    %c0_35 = arith.constant 0 : index
    %51 = vector.load %arg5[%c0_33, %c0_34, %c0_35] : memref<1x1x8xf32, #tpu.memory_space<vmem>>, vector<1x1x8xf32>
    %52 = vector.shape_cast %51 : vector<1x1x8xf32> to vector<1x8xf32>
    %53 = arith.mulf %39, %50 : vector<1x8xf32>
    %54 = arith.subf %52, %53 : vector<1x8xf32>
    %55 = tpu.concatenate %50, %54 in 0 : vector<1x8xf32>, vector<1x8xf32> -> vector<2x8xf32>
    %c0_36 = arith.constant 0 : index
    %c0_37 = arith.constant 0 : index
    %56 = vector.load %arg10[%c0_36, %c0_37] : memref<8x128xf32, #tpu.memory_space<vmem>>, vector<8x128xf32>
    %cst_38 = arith.constant dense<0.000000e+00> : vector<2x128xf32>
    %57 = tpu.matmul %55, %56, %cst_38 {dimension_numbers = #tpu.dot_dimension_numbers<[1], [0], [0], [1], [0, 0, 1, 1], [], []>} : vector<2x8xf32>, vector<8x128xf32>, vector<2x128xf32> -> vector<2x128xf32>
    %58 = vector.extract_strided_slice %57 {offsets = [0, 0], sizes = [1, 128], strides = [1, 1]} : vector<2x128xf32> to vector<1x128xf32>
    %59 = vector.broadcast %58 : vector<1x128xf32> to vector<32x128xf32>
    %60 = arith.mulf %28, %59 : vector<32x128xf32>
    %61 = vector.extract_strided_slice %57 {offsets = [1, 0], sizes = [1, 128], strides = [1, 1]} : vector<2x128xf32> to vector<1x128xf32>
    %62 = vector.broadcast %61 : vector<1x128xf32> to vector<32x128xf32>
    %63 = arith.addf %60, %62 : vector<32x128xf32>
    %cst_39 = arith.constant 0.000000e+00 : f32
    %64 = vector.broadcast %cst_39 : f32 to vector<32x128xf32>
    %65 = arith.maximumf %63, %64 : vector<32x128xf32>
    %c0_40 = arith.constant 0 : index
    %c0_41 = arith.constant 0 : index
    %66 = vector.load %arg6[%c0_40, %c0_41] : memref<2x6xf32, #tpu.memory_space<vmem>>, vector<2x6xf32>
    %67 = arith.truncf %66 : vector<2x6xf32> to vector<2x6xbf16>
    %c0_42 = arith.constant 0 : index
    %c0_43 = arith.constant 0 : index
    %68 = vector.load %arg7[%c0_42, %c0_43] : memref<6x128xbf16, #tpu.memory_space<vmem>>, vector<6x128xbf16>
    %cst_44 = arith.constant dense<0.000000e+00> : vector<2x128xf32>
    %69 = tpu.matmul %67, %68, %cst_44 {dimension_numbers = #tpu.dot_dimension_numbers<[1], [0], [0], [1], [0, 0, 1, 1], [], []>} : vector<2x6xbf16>, vector<6x128xbf16>, vector<2x128xf32> -> vector<2x128xf32>
    %c0_45 = arith.constant 0 : index
    %c0_46 = arith.constant 0 : index
    %70 = vector.load %arg8[%c0_45, %c0_46] : memref<1x128xf32, #tpu.memory_space<vmem>>, vector<1x128xf32>
    %71 = vector.broadcast %70 : vector<1x128xf32> to vector<2x128xf32>
    %72 = arith.addf %69, %71 : vector<2x128xf32>
    %73 = vector.shape_cast %65 : vector<32x128xf32> to vector<2x16x128xf32>
    %c0_i32_47 = arith.constant 0 : i32
    %74 = arith.cmpi eq, %arg0, %c0_i32_47 : i32
    %cst_48 = arith.constant 1.000000e+00 : f32
    %cst_49 = arith.constant 0.000000e+00 : f32
    %75 = arith.select %74, %cst_48, %cst_49 : f32
    %76 = vector.shape_cast %72 : vector<2x128xf32> to vector<2x1x128xf32>
    %77 = vector.broadcast %75 : f32 to vector<2x1x128xf32>
    %78 = arith.mulf %77, %76 : vector<2x1x128xf32>
    %79 = vector.broadcast %78 : vector<2x1x128xf32> to vector<2x16x128xf32>
    %80 = arith.addf %73, %79 : vector<2x16x128xf32>
    %c1_i32 = arith.constant 1 : i32
    %81 = arith.addi %arg0, %c1_i32 : i32
    %c2_i32 = arith.constant 2 : i32
    %82 = arith.cmpi slt, %81, %c2_i32 : i32
    %83 = arith.extui %82 : i1 to i32
    %c0_i32_50 = arith.constant 0 : i32
    %84 = arith.cmpi ne, %83, %c0_i32_50 : i32
    scf.if %84 {
      %c0_54 = arith.constant 0 : index
      %c8_55 = arith.constant 8 : index
      %c0_56 = arith.constant 0 : index
      %89 = vector.load %arg12[%c0_54, %c8_55, %c0_56] : memref<2x32x128xf32, #tpu.memory_space<vmem>>, vector<2x16x128xf32>
      tpu.vector_store %arg12[%c0_54, %c8_55, %c0_56], %80 {strides = array<i32>} : memref<2x32x128xf32, #tpu.memory_space<vmem>>, vector<2x16x128xf32>,
    } else {
    }
    %c1_i32_51 = arith.constant 1 : i32
    %85 = arith.addi %arg0, %c1_i32_51 : i32
    %c2_i32_52 = arith.constant 2 : i32
    %86 = arith.cmpi eq, %85, %c2_i32_52 : i32
    %87 = arith.extui %86 : i1 to i32
    %c0_i32_53 = arith.constant 0 : i32
    %88 = arith.cmpi ne, %87, %c0_i32_53 : i32
    scf.if %88 {
      %c0_54 = arith.constant 0 : index
      %c0_55 = arith.constant 0 : index
      %c0_56 = arith.constant 0 : index
      %89 = vector.load %arg11[%c0_54, %c0_55, %c0_56] : memref<2x16x128xf32, #tpu.memory_space<vmem>>, vector<2x16x128xf32>
      tpu.vector_store %arg11[%c0_54, %c0_55, %c0_56], %80 {strides = array<i32>} : memref<2x16x128xf32, #tpu.memory_space<vmem>>, vector<2x16x128xf32>,
    } else {
    }
    return
  }
  func.func @transform_0(%arg0: i32) -> (i32, i32, i32) {
    %c0_i32 = arith.constant 0 : i32
    %c0_i32_0 = arith.constant 0 : i32
    %c0_i32_1 = arith.constant 0 : i32
    %c0_i32_2 = arith.constant 0 : i32
    return %c0_i32, %c0_i32_0, %c0_i32_1 : i32, i32, i32
  }
  func.func @transform_1(%arg0: i32) -> (i32, i32, i32, i32) {
    %c0_i32 = arith.constant 0 : i32
    %c0_i32_0 = arith.constant 0 : i32
    %c0_i32_1 = arith.constant 0 : i32
    %c0_i32_2 = arith.constant 0 : i32
    return %arg0, %c0_i32, %c0_i32_0, %c0_i32_1 : i32, i32, i32, i32
  }
  func.func @transform_2(%arg0: i32) -> (i32, i32, i32) {
    %c0_i32 = arith.constant 0 : i32
    %c0_i32_0 = arith.constant 0 : i32
    %c0_i32_1 = arith.constant 0 : i32
    return %arg0, %c0_i32, %c0_i32_0 : i32, i32, i32
  }
  func.func @transform_3(%arg0: i32) -> (i32, i32, i32) {
    %c0_i32 = arith.constant 0 : i32
    %c0_i32_0 = arith.constant 0 : i32
    %c0_i32_1 = arith.constant 0 : i32
    return %arg0, %c0_i32, %c0_i32_0 : i32, i32, i32
  }
  func.func @transform_4(%arg0: i32) -> (i32, i32, i32) {
    %c0_i32 = arith.constant 0 : i32
    %c0_i32_0 = arith.constant 0 : i32
    %c0_i32_1 = arith.constant 0 : i32
    return %arg0, %c0_i32, %c0_i32_0 : i32, i32, i32
  }
  func.func @transform_5(%arg0: i32) -> (i32, i32) {
    %c0_i32 = arith.constant 0 : i32
    %c0_i32_0 = arith.constant 0 : i32
    %c0_i32_1 = arith.constant 0 : i32
    return %c0_i32, %c0_i32_0 : i32, i32
  }
  func.func @transform_6(%arg0: i32) -> (i32, i32) {
    %c0_i32 = arith.constant 0 : i32
    %c0_i32_0 = arith.constant 0 : i32
    %c0_i32_1 = arith.constant 0 : i32
    return %c0_i32, %c0_i32_0 : i32, i32
  }
  func.func @transform_7(%arg0: i32) -> (i32, i32) {
    %c0_i32 = arith.constant 0 : i32
    %c0_i32_0 = arith.constant 0 : i32
    %c0_i32_1 = arith.constant 0 : i32
    return %c0_i32, %c0_i32_0 : i32, i32
  }
  func.func @transform_8(%arg0: i32) -> (i32, i32) {
    %c0_i32 = arith.constant 0 : i32
    %c0_i32_0 = arith.constant 0 : i32
    %c0_i32_1 = arith.constant 0 : i32
    return %c0_i32, %c0_i32_0 : i32, i32
  }
  func.func @transform_9(%arg0: i32) -> (i32, i32) {
    %c0_i32 = arith.constant 0 : i32
    %c0_i32_0 = arith.constant 0 : i32
    %c0_i32_1 = arith.constant 0 : i32
    return %c0_i32, %c0_i32_0 : i32, i32
  }
  func.func @transform_10(%arg0: i32) -> (i32, i32, i32) {
    %c0_i32 = arith.constant 0 : i32
    %c0_i32_0 = arith.constant 0 : i32
    %c0_i32_1 = arith.constant 0 : i32
    %c0_i32_2 = arith.constant 0 : i32
    return %c0_i32, %c0_i32_0, %c0_i32_1 : i32, i32, i32
  }
}

</mosaic_0001>

<llo_original>
// kernel: conv_block_forward.1
$region0: #{conv_block_forward.1}
  #allocation0 [shape = 'u32[]', space=smem, size = 0x4, offset = 0x4, fixed_abs, tag = 'smem constant byte address 0x4 - core index']
  #allocation1 [shape = 'u32[144,128]{1,0:T(1,128)}', space=vmem, size = 0x12000, scoped, tag = 'internal scratch']
  #allocation2 [shape = 'f32[2,32,128]{2,1,0:T(8,128)}', space=vmem, size = 0x8000, scoped, tag = 'scratch operand']
  %s0 = inlined_call_operand.vmem [shape: f32[2,16,128], index: 0, kind: input, shape index: {}]
  %s1 = inlined_call_operand.vmem [shape: bf16[2,3,128,128], index: 1, kind: input, shape index: {}]
  %s2 = inlined_call_operand.vmem [shape: f32[2,1,128], index: 2, kind: input, shape index: {}]
  %s3 = inlined_call_operand.vmem [shape: f32[2,1,8], index: 3, kind: input, shape index: {}]
  %s4 = inlined_call_operand.vmem [shape: f32[2,1,8], index: 4, kind: input, shape index: {}]
  %s5 = inlined_call_operand.vmem [shape: f32[2,6], index: 5, kind: input, shape index: {}]
  %s6 = inlined_call_operand.vmem [shape: bf16[6,128], index: 6, kind: input, shape index: {}]
  %s7 = inlined_call_operand.vmem [shape: f32[1,128], index: 7, kind: input, shape index: {}]
  %s8 = inlined_call_operand.vmem [shape: f32[128,8], index: 8, kind: input, shape index: {}]
  %s9 = inlined_call_operand.vmem [shape: f32[8,128], index: 9, kind: input, shape index: {}]
  %s10 = inlined_call_operand.vmem [shape: f32[2,16,128], index: 10, kind: output, shape index: {}]
  %s11 = sld [smem:[#allocation0]]
  $region85: #{conv_block_forward.1} parent=0
    _
  %s13 = ssub.s32 1, %s11
  %s14 = scalar_select 0, %s13, %s11
  loop: start=0, step=1, limit=4
  $region2: #{conv_block_forward.1} parent=0 // loop_pre_header
    _
  $region3: #{conv_block_forward.1} parent=0 // loop_header
    %s16 = sphi 0, %s20
    %p17 = scmp.ge.s32.totalorder %s16, 4
    %s24 = sphi 0, %s24
    %s26 = sphi 0, %s24
    %s27 = sphi 0, %s26
    %s41 = sphi 0, %s27
    %s47 = sphi 0, %s49
    %s50 = sphi 0, %s47
    %s51 = sphi 0, %s50
    %s67 = sphi 0, %s51
    %s73 = sphi 0, %s75
    %s76 = sphi 0, %s73
    %s77 = sphi 0, %s76
    %s93 = sphi 0, %s77
    %s99 = sphi 0, %s101
    %s102 = sphi 0, %s99
    %s103 = sphi 0, %s102
    %s119 = sphi 0, %s103
    %s125 = sphi 0, %s127
    %s128 = sphi 0, %s125
    %s129 = sphi 0, %s128
    %s145 = sphi 0, %s129
    %s149 = sphi 0, %s149
    %s151 = sphi 0, %s149
    %s152 = sphi 0, %s151
    %s166 = sphi 0, %s152
    %s170 = sphi 0, %s170
    %s172 = sphi 0, %s170
    %s173 = sphi 0, %s172
    %s187 = sphi 0, %s173
    %s191 = sphi 0, %s191
    %s193 = sphi 0, %s191
    %s194 = sphi 0, %s193
    %s208 = sphi 0, %s194
    %s212 = sphi 0, %s212
    %s214 = sphi 0, %s212
    %s215 = sphi 0, %s214
    %s229 = sphi 0, %s215
    %s233 = sphi 0, %s233
    %s235 = sphi 0, %s233
    %s236 = sphi 0, %s235
    %s250 = sphi 0, %s236
    %s254 = sphi 0, %s254
    %s256 = sphi 0, %s254
    %s257 = sphi 0, %s256
    %s271 = sphi 0, %s257
  $region4: #{conv_block_forward.1} parent=0 // loop_header_branch
    %19 = sbr.rel (%p17) target = $region8
  $region5: #{conv_block_forward.1} parent=0 // loop_body
    %s21 = ssub.s32 %s16, 1
    %s22 = ssub.s32 %s16, 2
    %s23 = sadd.s32 %s16, 1
    %s25 = sadd.s32 %s24, 1
    %p28 = scmp.eq.s32.totalorder %s16, 1
    %p29 = scmp.ne.s32.totalorder %s24, %s26
    %p30 = scmp.eq.s32.totalorder %s16, 0
    %p31 = por %p29, %p30
    %p32 = scmp.ne.s32.totalorder %s24, %s26
    %p33 = scmp.eq.s32.totalorder %s21, 1
    %p34 = por %p32, %p33
    %p35 = scmp.ne.s32.totalorder %s26, %s27
    %p36 = scmp.eq.s32.totalorder %s21, 0
    %p37 = por %p35, %p36
    %p38 = scmp.ne.s32.totalorder %s26, %s27
    %p39 = scmp.eq.s32.totalorder %s22, 1
    %p40 = por %p38, %p39
    %p42 = scmp.ne.s32.totalorder %s27, %s41
    %p43 = scmp.eq.s32.totalorder %s22, 0
    %p44 = por %p42, %p43
    %s45 = ssub.s32 %s16, %s23
    %p46 = scmp.eq.s32.totalorder %s45, 0
    %s48 = sadd.s32 %s47, 1
    %s49 = scalar_select %p46, %s47, %s48
    %p52 = pneg %p46
    %p53 = scmp.eq.s32.totalorder %s16, 1
    %p54 = por %p52, %p53
    %p55 = scmp.ne.s32.totalorder %s47, %s50
    %p56 = scmp.eq.s32.totalorder %s16, 0
    %p57 = por %p55, %p56
    %p58 = scmp.ne.s32.totalorder %s47, %s50
    %p59 = scmp.eq.s32.totalorder %s21, 1
    %p60 = por %p58, %p59
    %p61 = scmp.ne.s32.totalorder %s50, %s51
    %p62 = scmp.eq.s32.totalorder %s21, 0
    %p63 = por %p61, %p62
    %p64 = scmp.ne.s32.totalorder %s50, %s51
    %p65 = scmp.eq.s32.totalorder %s22, 1
    %p66 = por %p64, %p65
    %p68 = scmp.ne.s32.totalorder %s51, %s67
    %p69 = scmp.eq.s32.totalorder %s22, 0
    %p70 = por %p68, %p69
    %s71 = ssub.s32 %s16, %s23
    %p72 = scmp.eq.s32.totalorder %s71, 0
    %s74 = sadd.s32 %s73, 1
    %s75 = scalar_select %p72, %s73, %s74
    %p78 = pneg %p72
    %p79 = scmp.eq.s32.totalorder %s16, 1
    %p80 = por %p78, %p79
    %p81 = scmp.ne.s32.totalorder %s73, %s76
    %p82 = scmp.eq.s32.totalorder %s16, 0
    %p83 = por %p81, %p82
    %p84 = scmp.ne.s32.totalorder %s73, %s76
    %p85 = scmp.eq.s32.totalorder %s21, 1
    %p86 = por %p84, %p85
    %p87 = scmp.ne.s32.totalorder %s76, %s77
    %p88 = scmp.eq.s32.totalorder %s21, 0
    %p89 = por %p87, %p88
    %p90 = scmp.ne.s32.totalorder %s76, %s77
    %p91 = scmp.eq.s32.totalorder %s22, 1
    %p92 = por %p90, %p91
    %p94 = scmp.ne.s32.totalorder %s77, %s93
    %p95 = scmp.eq.s32.totalorder %s22, 0
    %p96 = por %p94, %p95
    %s97 = ssub.s32 %s16, %s23
    %p98 = scmp.eq.s32.totalorder %s97, 0
    %s100 = sadd.s32 %s99, 1
    %s101 = scalar_select %p98, %s99, %s100
    %p104 = pneg %p98
    %p105 = scmp.eq.s32.totalorder %s16, 1
    %p106 = por %p104, %p105
    %p107 = scmp.ne.s32.totalorder %s99, %s102
    %p108 = scmp.eq.s32.totalorder %s16, 0
    %p109 = por %p107, %p108
    %p110 = scmp.ne.s32.totalorder %s99, %s102
    %p111 = scmp.eq.s32.totalorder %s21, 1
    %p112 = por %p110, %p111
    %p113 = scmp.ne.s32.totalorder %s102, %s103
    %p114 = scmp.eq.s32.totalorder %s21, 0
    %p115 = por %p113, %p114
    %p116 = scmp.ne.s32.totalorder %s102, %s103
    %p117 = scmp.eq.s32.totalorder %s22, 1
    %p118 = por %p116, %p117
    %p120 = scmp.ne.s32.totalorder %s103, %s119
    %p121 = scmp.eq.s32.totalorder %s22, 0
    %p122 = por %p120, %p121
    %s123 = ssub.s32 %s16, %s23
    %p124 = scmp.eq.s32.totalorder %s123, 0
    %s126 = sadd.s32 %s125, 1
    %s127 = scalar_select %p124, %s125, %s126
    %p130 = pneg %p124
    %p131 = scmp.eq.s32.totalorder %s16, 1
    %p132 = por %p130, %p131
    %p133 = scmp.ne.s32.totalorder %s125, %s128
    %p134 = scmp.eq.s32.totalorder %s16, 0
    %p135 = por %p133, %p134
    %p136 = scmp.ne.s32.totalorder %s125, %s128
    %p137 = scmp.eq.s32.totalorder %s21, 1
    %p138 = por %p136, %p137
    %p139 = scmp.ne.s32.totalorder %s128, %s129
    %p140 = scmp.eq.s32.totalorder %s21, 0
    %p141 = por %p139, %p140
    %p142 = scmp.ne.s32.totalorder %s128, %s129
    %p143 = scmp.eq.s32.totalorder %s22, 1
    %p144 = por %p142, %p143
    %p146 = scmp.ne.s32.totalorder %s129, %s145
    %p147 = scmp.eq.s32.totalorder %s22, 0
    %p148 = por %p146, %p147
    %s150 = sadd.s32 %s149, 1
    %p153 = scmp.eq.s32.totalorder %s16, 1
    %p154 = scmp.ne.s32.totalorder %s149, %s151
    %p155 = scmp.eq.s32.totalorder %s16, 0
    %p156 = por %p154, %p155
    %p157 = scmp.ne.s32.totalorder %s149, %s151
    %p158 = scmp.eq.s32.totalorder %s21, 1
    %p159 = por %p157, %p158
    %p160 = scmp.ne.s32.totalorder %s151, %s152
    %p161 = scmp.eq.s32.totalorder %s21, 0
    %p162 = por %p160, %p161
    %p163 = scmp.ne.s32.totalorder %s151, %s152
    %p164 = scmp.eq.s32.totalorder %s22, 1
    %p165 = por %p163, %p164
    %p167 = scmp.ne.s32.totalorder %s152, %s166
    %p168 = scmp.eq.s32.totalorder %s22, 0
    %p169 = por %p167, %p168
    %s171 = sadd.s32 %s170, 1
    %p174 = scmp.eq.s32.totalorder %s16, 1
    %p175 = scmp.ne.s32.totalorder %s170, %s172
    %p176 = scmp.eq.s32.totalorder %s16, 0
    %p177 = por %p175, %p176
    %p178 = scmp.ne.s32.totalorder %s170, %s172
    %p179 = scmp.eq.s32.totalorder %s21, 1
    %p180 = por %p178, %p179
    %p181 = scmp.ne.s32.totalorder %s172, %s173
    %p182 = scmp.eq.s32.totalorder %s21, 0
    %p183 = por %p181, %p182
    %p184 = scmp.ne.s32.totalorder %s172, %s173
    %p185 = scmp.eq.s32.totalorder %s22, 1
    %p186 = por %p184, %p185
    %p188 = scmp.ne.s32.totalorder %s173, %s187
    %p189 = scmp.eq.s32.totalorder %s22, 0
    %p190 = por %p188, %p189
    %s192 = sadd.s32 %s191, 1
    %p195 = scmp.eq.s32.totalorder %s16, 1
    %p196 = scmp.ne.s32.totalorder %s191, %s193
    %p197 = scmp.eq.s32.totalorder %s16, 0
    %p198 = por %p196, %p197
    %p199 = scmp.ne.s32.totalorder %s191, %s193
    %p200 = scmp.eq.s32.totalorder %s21, 1
    %p201 = por %p199, %p200
    %p202 = scmp.ne.s32.totalorder %s193, %s194
    %p203 = scmp.eq.s32.totalorder %s21, 0
    %p204 = por %p202, %p203
    %p205 = scmp.ne.s32.totalorder %s193, %s194
    %p206 = scmp.eq.s32.totalorder %s22, 1
    %p207 = por %p205, %p206
    %p209 = scmp.ne.s32.totalorder %s194, %s208
    %p210 = scmp.eq.s32.totalorder %s22, 0
    %p211 = por %p209, %p210
    %s213 = sadd.s32 %s212, 1
    %p216 = scmp.eq.s32.totalorder %s16, 1
    %p217 = scmp.ne.s32.totalorder %s212, %s214
    %p218 = scmp.eq.s32.totalorder %s16, 0
    %p219 = por %p217, %p218
    %p220 = scmp.ne.s32.totalorder %s212, %s214
    %p221 = scmp.eq.s32.totalorder %s21, 1
    %p222 = por %p220, %p221
    %p223 = scmp.ne.s32.totalorder %s214, %s215
    %p224 = scmp.eq.s32.totalorder %s21, 0
    %p225 = por %p223, %p224
    %p226 = scmp.ne.s32.totalorder %s214, %s215
    %p227 = scmp.eq.s32.totalorder %s22, 1
    %p228 = por %p226, %p227
    %p230 = scmp.ne.s32.totalorder %s215, %s229
    %p231 = scmp.eq.s32.totalorder %s22, 0
    %p232 = por %p230, %p231
    %s234 = sadd.s32 %s233, 1
    %p237 = scmp.eq.s32.totalorder %s16, 1
    %p238 = scmp.ne.s32.totalorder %s233, %s235
    %p239 = scmp.eq.s32.totalorder %s16, 0
    %p240 = por %p238, %p239
    %p241 = scmp.ne.s32.totalorder %s233, %s235
    %p242 = scmp.eq.s32.totalorder %s21, 1
    %p243 = por %p241, %p242
    %p244 = scmp.ne.s32.totalorder %s235, %s236
    %p245 = scmp.eq.s32.totalorder %s21, 0
    %p246 = por %p244, %p245
    %p247 = scmp.ne.s32.totalorder %s235, %s236
    %p248 = scmp.eq.s32.totalorder %s22, 1
    %p249 = por %p247, %p248
    %p251 = scmp.ne.s32.totalorder %s236, %s250
    %p252 = scmp.eq.s32.totalorder %s22, 0
    %p253 = por %p251, %p252
    %s255 = sadd.s32 %s254, 1
    %p258 = scmp.eq.s32.totalorder %s16, 1
    %p259 = scmp.ne.s32.totalorder %s254, %s256
    %p260 = scmp.eq.s32.totalorder %s16, 0
    %p261 = por %p259, %p260
    %p262 = scmp.ne.s32.totalorder %s254, %s256
    %p263 = scmp.eq.s32.totalorder %s21, 1
    %p264 = por %p262, %p263
    %p265 = scmp.ne.s32.totalorder %s256, %s257
    %p266 = scmp.eq.s32.totalorder %s21, 0
    %p267 = por %p265, %p266
    %p268 = scmp.ne.s32.totalorder %s256, %s257
    %p269 = scmp.eq.s32.totalorder %s22, 1
    %p270 = por %p268, %p269
    %p272 = scmp.ne.s32.totalorder %s257, %s271
    %p273 = scmp.eq.s32.totalorder %s22, 0
    %p274 = por %p272, %p273
    %p275 = scmp.le.s32.totalorder 1, %s16
    %p276 = scmp.lt.s32.totalorder %s16, 3
    %p277 = pnand %p275, %p276
    %p278 = pneg %p277
    // Predicated region
    $region9: #{conv_block_forward.1} parent=5 // pred_check
      _
    $region10: #{conv_block_forward.1} parent=5 // pred_check_branch
      %280 = sbr.rel (%p277) target = $region12
    $region11: #{conv_block_forward.1} parent=5 // pred_region
      %s281 = ssub.s32 %s16, 1
      // Predicated region
      $region13: #{conv_block_forward.1} parent=11 // pred_check
        %p282 = pneg %p37
      $region14: #{conv_block_forward.1} parent=11 // pred_check_branch
        %284 = sbr.rel (%p282) target = $region16
      $region15: #{conv_block_forward.1} parent=11 // pred_region
        _
      $region16: #{conv_block_forward.1} parent=11 // pred_fallthru
        _
      // Predicated region
      $region17: #{conv_block_forward.1} parent=11 // pred_check
        %p285 = pneg %p162
      $region18: #{conv_block_forward.1} parent=11 // pred_check_branch
        %287 = sbr.rel (%p285) target = $region20
      $region19: #{conv_block_forward.1} parent=11 // pred_region
        _
      $region20: #{conv_block_forward.1} parent=11 // pred_fallthru
        _
      // Predicated region
      $region21: #{conv_block_forward.1} parent=11 // pred_check
        %p288 = pneg %p183
      $region22: #{conv_block_forward.1} parent=11 // pred_check_branch
        %290 = sbr.rel (%p288) target = $region24
      $region23: #{conv_block_forward.1} parent=11 // pred_region
        _
      $region24: #{conv_block_forward.1} parent=11 // pred_fallthru
        _
      // Predicated region
      $region25: #{conv_block_forward.1} parent=11 // pred_check
        %p291 = pneg %p204
      $region26: #{conv_block_forward.1} parent=11 // pred_check_branch
        %293 = sbr.rel (%p291) target = $region28
      $region27: #{conv_block_forward.1} parent=11 // pred_region
        _
      $region28: #{conv_block_forward.1} parent=11 // pred_fallthru
        _
      // Predicated region
      $region29: #{conv_block_forward.1} parent=11 // pred_check
        %p294 = pneg %p225
      $region30: #{conv_block_forward.1} parent=11 // pred_check_branch
        %296 = sbr.rel (%p294) target = $region32
      $region31: #{conv_block_forward.1} parent=11 // pred_region
        _
      $region32: #{conv_block_forward.1} parent=11 // pred_fallthru
        _
      // Predicated region
      $region33: #{conv_block_forward.1} parent=11 // pred_check
        %p297 = pneg %p246
      $region34: #{conv_block_forward.1} parent=11 // pred_check_branch
        %299 = sbr.rel (%p297) target = $region36
      $region35: #{conv_block_forward.1} parent=11 // pred_region
        _
      $region36: #{conv_block_forward.1} parent=11 // pred_fallthru
        _
    $region12: #{conv_block_forward.1} parent=5 // pred_fallthru
      _
    %p300 = scmp.lt.s32.totalorder %s16, 2
    // Predicated region
    $region37: #{conv_block_forward.1} parent=5 // pred_check
      %p301 = pneg %p300
    $region38: #{conv_block_forward.1} parent=5 // pred_check_branch
      %303 = sbr.rel (%p301) target = $region40
    $region39: #{conv_block_forward.1} parent=5 // pred_region
      // Predicated region
      $region41: #{conv_block_forward.1} parent=39 // pred_check
        %p304 = pneg %p57
      $region42: #{conv_block_forward.1} parent=39 // pred_check_branch
        %306 = sbr.rel (%p304) target = $region44
      $region43: #{conv_block_forward.1} parent=39 // pred_region
        %p307 = scmp.lt.s32.totalorder %s16, 1
        %s308 = scalar_select %p307, %s16, 1
        %s309 = smul.addr %s308, 48
        %s310 = smul.addr %s309, 4
        %s311 = scalar_lea.vmem %s1, %s310
      $region44: #{conv_block_forward.1} parent=39 // pred_fallthru
        _
      // Predicated region
      $region45: #{conv_block_forward.1} parent=39 // pred_check
        %p312 = pneg %p83
      $region46: #{conv_block_forward.1} parent=39 // pred_check_branch
        %314 = sbr.rel (%p312) target = $region48
      $region47: #{conv_block_forward.1} parent=39 // pred_region
        %p315 = scmp.lt.s32.totalorder %s16, 1
        %s316 = scalar_select %p315, %s16, 1
        %s317 = scalar_lea.vmem %s2, %s316
      $region48: #{conv_block_forward.1} parent=39 // pred_fallthru
        _
      // Predicated region
      $region49: #{conv_block_forward.1} parent=39 // pred_check
        %p318 = pneg %p109
      $region50: #{conv_block_forward.1} parent=39 // pred_check_branch
        %320 = sbr.rel (%p318) target = $region52
      $region51: #{conv_block_forward.1} parent=39 // pred_region
        %p321 = scmp.lt.s32.totalorder %s16, 1
        %s322 = scalar_select %p321, %s16, 1
        %s323 = scalar_lea.vmem %s3, %s322
      $region52: #{conv_block_forward.1} parent=39 // pred_fallthru
        _
      // Predicated region
      $region53: #{conv_block_forward.1} parent=39 // pred_check
        %p324 = pneg %p135
      $region54: #{conv_block_forward.1} parent=39 // pred_check_branch
        %326 = sbr.rel (%p324) target = $region56
      $region55: #{conv_block_forward.1} parent=39 // pred_region
        %p327 = scmp.lt.s32.totalorder %s16, 1
        %s328 = scalar_select %p327, %s16, 1
        %s329 = scalar_lea.vmem %s4, %s328
      $region56: #{conv_block_forward.1} parent=39 // pred_fallthru
        _
    $region40: #{conv_block_forward.1} parent=5 // pred_fallthru
      _
    %p330 = scmp.le.s32.totalorder 1, %s16
    %p331 = scmp.lt.s32.totalorder %s16, 3
    %p332 = pnand %p330, %p331
    %p333 = pneg %p332
    // Predicated region
    $region57: #{conv_block_forward.1} parent=5 // pred_check
      _
    $region58: #{conv_block_forward.1} parent=5 // pred_check_branch
      %335 = sbr.rel (%p332) target = $region60
    $region59: #{conv_block_forward.1} parent=5 // pred_region
      %s336 = ssub.s32 %s16, 1
      %p337 = pneg %p37
      %p338 = pneg %p34
      %p339 = scmp.lt.s32.totalorder %s21, 1
      %s340 = scalar_select %p339, %s21, 1
      %s341 = smul.addr %s340, 48
      %s342 = smul.addr %s341, 4
      %s343 = scalar_lea.vmem %s1, %s342
      %p344 = pneg %p63
      %p345 = pneg %p60
      %p346 = scmp.lt.s32.totalorder %s21, 1
      %s347 = scalar_select %p346, %s21, 1
      %s348 = scalar_lea.vmem %s2, %s347
      %p349 = pneg %p89
      %p350 = pneg %p86
      %p351 = scmp.lt.s32.totalorder %s21, 1
      %s352 = scalar_select %p351, %s21, 1
      %s353 = scalar_lea.vmem %s3, %s352
      %p354 = pneg %p115
      %p355 = pneg %p112
      %p356 = scmp.lt.s32.totalorder %s21, 1
      %s357 = scalar_select %p356, %s21, 1
      %s358 = scalar_lea.vmem %s4, %s357
      %p359 = pneg %p141
      %p360 = pneg %p138
      %p361 = pneg %p162
      %p362 = pneg %p159
      %p363 = pneg %p183
      %p364 = pneg %p180
      %p365 = pneg %p204
      %p366 = pneg %p201
      %p367 = pneg %p225
      %p368 = pneg %p222
      %p369 = pneg %p246
      %p370 = pneg %p243
      %p371 = pneg %p267
      %p372 = pneg %p264
      %p373 = scmp.lt.s32.totalorder %s21, 1
      %s374 = scalar_select %p373, %s21, 1
      %s375 = smul.addr %s374, 48
      %s376 = smul.addr %s375, 4
      %s377 = scalar_lea.vmem %s1, %s376
      %p378 = scmp.lt.s32.totalorder %s21, 1
      %s379 = scalar_select %p378, %s21, 1
      %s380 = scalar_lea.vmem %s2, %s379
      %p381 = scmp.lt.s32.totalorder %s21, 1
      %s382 = scalar_select %p381, %s21, 1
      %s383 = scalar_lea.vmem %s3, %s382
      %p384 = scmp.lt.s32.totalorder %s21, 1
      %s385 = scalar_select %p384, %s21, 1
      %s386 = scalar_lea.vmem %s4, %s385
      %p388 = scmp.eq.s32.totalorder %s21, 0
      // Predicated region
      $region61: #{conv_block_forward.1} parent=59 // pred_check
        %p389 = pneg %p388
      $region62: #{conv_block_forward.1} parent=59 // pred_check_branch
        %391 = sbr.rel (%p389) target = $region64
      $region63: #{conv_block_forward.1} parent=59 // pred_region
        %392 = vst [vmem:[#allocation2] sm:$0xff] 0.0
        %393 = vst [vmem:[#allocation2 + $0x20] sm:$0xff] 0.0
        %394 = vst [vmem:[#allocation2 + $0x18] sm:$0xff] 0.0
        %395 = vst [vmem:[#allocation2 + $0x38] sm:$0xff] 0.0
        %v396 = vld [vmem:[%s0] sm:$0xff]
        %v397 = vld [vmem:[%s0 + $0x8] sm:$0xff]
        %v398 = vld [vmem:[%s0 + $0x10] sm:$0xff]
        %v399 = vld [vmem:[%s0 + $0x18] sm:$0xff]
        %400 = vst [vmem:[#allocation2 + $0x8] sm:$0xff] %v396
        %401 = vst [vmem:[#allocation2 + $0x10] sm:$0xff] %v397
        %402 = vst [vmem:[#allocation2 + $0x28] sm:$0xff] %v398
        %403 = vst [vmem:[#allocation2 + $0x30] sm:$0xff] %v399
      $region64: #{conv_block_forward.1} parent=59 // pred_fallthru
        _
      %v404 = vld [vmem:[#allocation2 + $0x7] sm:$0xff]
      %v405 = vld [vmem:[#allocation2 + $0xf] sm:$0xff]
      %v406 = vld [vmem:[#allocation2 + $0x27] sm:$0xff]
      %v407 = vld [vmem:[#allocation2 + $0x2f] sm:$0xff]
      %v408 = vpack.c.bf16 %v405, %v404
      %v409 = vpack.c.bf16 %v407, %v406
      %v410 = vld [vmem:[%s377] sm:$0xf]
      %v411 = vld [vmem:[%s377 + $0x4] sm:$0xf]
      %v412 = vld [vmem:[%s377 + $0x8] sm:$0xf]
      %v413 = vld [vmem:[%s377 + $0xc] sm:$0xf]
      %v414 = vld [vmem:[%s377 + $0x10] sm:$0xf]
      %v415 = vld [vmem:[%s377 + $0x14] sm:$0xf]
      %v416 = vld [vmem:[%s377 + $0x18] sm:$0xf]
      %v417 = vld [vmem:[%s377 + $0x1c] sm:$0xf]
      %v418 = vld [vmem:[%s377 + $0x20] sm:$0xf]
      %v419 = vld [vmem:[%s377 + $0x24] sm:$0xf]
      %v420 = vld [vmem:[%s377 + $0x28] sm:$0xf]
      %v421 = vld [vmem:[%s377 + $0x2c] sm:$0xf]
      %v422 = vld [vmem:[%s377 + $0x30] sm:$0xf]
      %v423 = vld [vmem:[%s377 + $0x34] sm:$0xf]
      %v424 = vld [vmem:[%s377 + $0x38] sm:$0xf]
      %v425 = vld [vmem:[%s377 + $0x3c] sm:$0xf]
      %v426 = vld [vmem:[#allocation2 + $0x8] sm:$0xff]
      %v427 = vld [vmem:[#allocation2 + $0x10] sm:$0xff]
      %v428 = vld [vmem:[#allocation2 + $0x28] sm:$0xff]
      %v429 = vld [vmem:[#allocation2 + $0x30] sm:$0xff]
      %v430 = vpack.c.bf16 %v427, %v426
      %v431 = vpack.c.bf16 %v429, %v428
      %s432 = scalar_lea.vmem %s377, 64
      %v433 = vld [vmem:[%s432] sm:$0xf]
      %v434 = vld [vmem:[%s432 + $0x4] sm:$0xf]
      %v435 = vld [vmem:[%s432 + $0x8] sm:$0xf]
      %v436 = vld [vmem:[%s432 + $0xc] sm:$0xf]
      %v437 = vld [vmem:[%s432 + $0x10] sm:$0xf]
      %v438 = vld [vmem:[%s432 + $0x14] sm:$0xf]
      %v439 = vld [vmem:[%s432 + $0x18] sm:$0xf]
      %v440 = vld [vmem:[%s432 + $0x1c] sm:$0xf]
      %v441 = vld [vmem:[%s432 + $0x20] sm:$0xf]
      %v442 = vld [vmem:[%s432 + $0x24] sm:$0xf]
      %v443 = vld [vmem:[%s432 + $0x28] sm:$0xf]
      %v444 = vld [vmem:[%s432 + $0x2c] sm:$0xf]
      %v445 = vld [vmem:[%s432 + $0x30] sm:$0xf]
      %v446 = vld [vmem:[%s432 + $0x34] sm:$0xf]
      %v447 = vld [vmem:[%s432 + $0x38] sm:$0xf]
      %v448 = vld [vmem:[%s432 + $0x3c] sm:$0xf]
      %v465 = vunpack.c.l.b16 %v433
      %v466 = vunpack.c.l.b16 %v434
      %v467 = vunpack.c.l.b16 %v435
      %v468 = vunpack.c.l.b16 %v436
      %v469 = vunpack.c.l.b16 %v437
      %v470 = vunpack.c.l.b16 %v438
      %v471 = vunpack.c.l.b16 %v439
      %v472 = vunpack.c.l.b16 %v440
      %v473 = vunpack.c.l.b16 %v441
      %v474 = vunpack.c.l.b16 %v442
      %v475 = vunpack.c.l.b16 %v443
      %v476 = vunpack.c.l.b16 %v444
      %v477 = vunpack.c.l.b16 %v445
      %v478 = vunpack.c.l.b16 %v446
      %v479 = vunpack.c.l.b16 %v447
      %v480 = vunpack.c.l.b16 %v448
      %v481 = vpack.c.b16 %v466, %v465
      %v482 = vpack.c.b16 %v468, %v467
      %v483 = vpack.c.b16 %v470, %v469
      %v484 = vpack.c.b16 %v472, %v471
      %v485 = vpack.c.b16 %v474, %v473
      %v486 = vpack.c.b16 %v476, %v475
      %v487 = vpack.c.b16 %v478, %v477
      %v488 = vpack.c.b16 %v480, %v479
      %497 = vmatprep.subr.bf16.mxu0 0
      %498 = vmatpush1.bf16.msra.mxu0 %v481
      %499 = vmatprep.subr.bf16.mxu0 0
      %500 = vmatpush1.bf16.msra.mxu0 %v482
      %501 = vmatprep.subr.bf16.mxu0 0
      %502 = vmatpush1.bf16.msra.mxu0 %v483
      %503 = vmatprep.subr.bf16.mxu0 0
      %504 = vmatpush1.bf16.msra.mxu0 %v484
      %505 = vmatprep.subr.bf16.mxu0 0
      %506 = vmatpush1.bf16.msra.mxu0 %v485
      %507 = vmatprep.subr.bf16.mxu0 0
      %508 = vmatpush1.bf16.msra.mxu0 %v486
      %509 = vmatprep.subr.bf16.mxu0 0
      %510 = vmatpush1.bf16.msra.mxu0 %v487
      %511 = vmatprep.subr.bf16.mxu0 0
      %512 = vmatpush1.bf16.msra.mxu0 %v488
      %513 = vmatprep.subr.bf16.mxu0 0
      %514 = vmatpush1.bf16.msra.mxu0 0
      %515 = vmatprep.subr.bf16.mxu0 0
      %516 = vmatpush1.bf16.msra.mxu0 0
      %517 = vmatprep.subr.bf16.mxu0 0
      %518 = vmatpush1.bf16.msra.mxu0 0
      %519 = vmatprep.subr.bf16.mxu0 0
      %520 = vmatpush1.bf16.msra.mxu0 0
      %521 = vmatprep.subr.bf16.mxu0 0
      %522 = vmatpush1.bf16.msra.mxu0 0
      %523 = vmatprep.subr.bf16.mxu0 0
      %524 = vmatpush1.bf16.msra.mxu0 0
      %525 = vmatprep.subr.bf16.mxu0 0
      %526 = vmatpush1.bf16.msra.mxu0 0
      %527 = vmatprep.subr.bf16.mxu0 0
      %528 = vmatpush1.bf16.msra.mxu0 0
      %529 = vmatprep.mubr.bf16.mxu0 0
      %530 = vmatmul.mubr.bf16.gmra.mrb[0].mxu0 %v430
      %v531 = vpop.f32.mrb[0].mxu0
      %v532 = vadd.f32 0.0, %v531
      %v533 = vpop.f32.mrb[0].mxu0
      %v534 = vpop.f32.mrb[0].mxu0
      %v535 = vadd.f32 0.0, %v534
      %v536 = vpop.f32.mrb[0].mxu0
      %537 = vmatprep.mubr.bf16.mxu0 0
      %538 = vmatmul.mubr.bf16.gmra.mrb[0].mxu0 %v431
      %v539 = vpop.f32.mrb[0].mxu0
      %v540 = vadd.f32 0.0, %v539
      %v541 = vpop.f32.mrb[0].mxu0
      %v542 = vpop.f32.mrb[0].mxu0
      %v543 = vadd.f32 0.0, %v542
      %v544 = vpop.f32.mrb[0].mxu0
      %545 = vdwg.mxu0
      %v562 = vunpack.c.l.b16 %v410
      %v563 = vunpack.c.l.b16 %v411
      %v564 = vunpack.c.l.b16 %v412
      %v565 = vunpack.c.l.b16 %v413
      %v566 = vunpack.c.l.b16 %v414
      %v567 = vunpack.c.l.b16 %v415
      %v568 = vunpack.c.l.b16 %v416
      %v569 = vunpack.c.l.b16 %v417
      %v570 = vunpack.c.l.b16 %v418
      %v571 = vunpack.c.l.b16 %v419
      %v572 = vunpack.c.l.b16 %v420
      %v573 = vunpack.c.l.b16 %v421
      %v574 = vunpack.c.l.b16 %v422
      %v575 = vunpack.c.l.b16 %v423
      %v576 = vunpack.c.l.b16 %v424
      %v577 = vunpack.c.l.b16 %v425
      %v578 = vpack.c.b16 %v563, %v562
      %v579 = vpack.c.b16 %v565, %v564
      %v580 = vpack.c.b16 %v567, %v566
      %v581 = vpack.c.b16 %v569, %v568
      %v582 = vpack.c.b16 %v571, %v570
      %v583 = vpack.c.b16 %v573, %v572
      %v584 = vpack.c.b16 %v575, %v574
      %v585 = vpack.c.b16 %v577, %v576
      %594 = vmatprep.subr.bf16.mxu0 0
      %595 = vmatpush1.bf16.msra.mxu0 %v578
      %596 = vmatprep.subr.bf16.mxu0 0
      %597 = vmatpush1.bf16.msra.mxu0 %v579
      %598 = vmatprep.subr.bf16.mxu0 0
      %599 = vmatpush1.bf16.msra.mxu0 %v580
      %600 = vmatprep.subr.bf16.mxu0 0
      %601 = vmatpush1.bf16.msra.mxu0 %v581
      %602 = vmatprep.subr.bf16.mxu0 0
      %603 = vmatpush1.bf16.msra.mxu0 %v582
      %604 = vmatprep.subr.bf16.mxu0 0
      %605 = vmatpush1.bf16.msra.mxu0 %v583
      %606 = vmatprep.subr.bf16.mxu0 0
      %607 = vmatpush1.bf16.msra.mxu0 %v584
      %608 = vmatprep.subr.bf16.mxu0 0
      %609 = vmatpush1.bf16.msra.mxu0 %v585
      %610 = vmatprep.subr.bf16.mxu0 0
      %611 = vmatpush1.bf16.msra.mxu0 0
      %612 = vmatprep.subr.bf16.mxu0 0
      %613 = vmatpush1.bf16.msra.mxu0 0
      %614 = vmatprep.subr.bf16.mxu0 0
      %615 = vmatpush1.bf16.msra.mxu0 0
      %616 = vmatprep.subr.bf16.mxu0 0
      %617 = vmatpush1.bf16.msra.mxu0 0
      %618 = vmatprep.subr.bf16.mxu0 0
      %619 = vmatpush1.bf16.msra.mxu0 0
      %620 = vmatprep.subr.bf16.mxu0 0
      %621 = vmatpush1.bf16.msra.mxu0 0
      %622 = vmatprep.subr.bf16.mxu0 0
      %623 = vmatpush1.bf16.msra.mxu0 0
      %624 = vmatprep.subr.bf16.mxu0 0
      %625 = vmatpush1.bf16.msra.mxu0 0
      %626 = vmatprep.mubr.bf16.mxu0 0
      %627 = vmatmul.mubr.bf16.gmra.mrb[0].mxu0 %v408
      %v628 = vpop.f32.mrb[0].mxu0
      %v629 = vadd.f32 %v532, %v628
      %v630 = vpop.f32.mrb[0].mxu0
      %v631 = vpop.f32.mrb[0].mxu0
      %v632 = vadd.f32 %v535, %v631
      %v633 = vpop.f32.mrb[0].mxu0
      %634 = vmatprep.mubr.bf16.mxu0 0
      %635 = vmatmul.mubr.bf16.gmra.mrb[0].mxu0 %v409
      %v636 = vpop.f32.mrb[0].mxu0
      %v637 = vadd.f32 %v540, %v636
      %v638 = vpop.f32.mrb[0].mxu0
      %v639 = vpop.f32.mrb[0].mxu0
      %v640 = vadd.f32 %v543, %v639
      %v641 = vpop.f32.mrb[0].mxu0
      %642 = vdwg.mxu0
      %v643 = vld [vmem:[#allocation2 + $0x9] sm:$0xff]
      %v644 = vld [vmem:[#allocation2 + $0x11] sm:$0xff]
      %v645 = vld [vmem:[#allocation2 + $0x29] sm:$0xff]
      %v646 = vld [vmem:[#allocation2 + $0x31] sm:$0xff]
      %v647 = vpack.c.bf16 %v644, %v643
      %v648 = vpack.c.bf16 %v646, %v645
      %s649 = scalar_lea.vmem %s377, 128
      %v650 = vld [vmem:[%s649] sm:$0xf]
      %v651 = vld [vmem:[%s649 + $0x4] sm:$0xf]
      %v652 = vld [vmem:[%s649 + $0x8] sm:$0xf]
      %v653 = vld [vmem:[%s649 + $0xc] sm:$0xf]
      %v654 = vld [vmem:[%s649 + $0x10] sm:$0xf]
      %v655 = vld [vmem:[%s649 + $0x14] sm:$0xf]
      %v656 = vld [vmem:[%s649 + $0x18] sm:$0xf]
      %v657 = vld [vmem:[%s649 + $0x1c] sm:$0xf]
      %v658 = vld [vmem:[%s649 + $0x20] sm:$0xf]
      %v659 = vld [vmem:[%s649 + $0x24] sm:$0xf]
      %v660 = vld [vmem:[%s649 + $0x28] sm:$0xf]
      %v661 = vld [vmem:[%s649 + $0x2c] sm:$0xf]
      %v662 = vld [vmem:[%s649 + $0x30] sm:$0xf]
      %v663 = vld [vmem:[%s649 + $0x34] sm:$0xf]
      %v664 = vld [vmem:[%s649 + $0x38] sm:$0xf]
      %v665 = vld [vmem:[%s649 + $0x3c] sm:$0xf]
      %v682 = vunpack.c.l.b16 %v650
      %v683 = vunpack.c.l.b16 %v651
      %v684 = vunpack.c.l.b16 %v652
      %v685 = vunpack.c.l.b16 %v653
      %v686 = vunpack.c.l.b16 %v654
      %v687 = vunpack.c.l.b16 %v655
      %v688 = vunpack.c.l.b16 %v656
      %v689 = vunpack.c.l.b16 %v657
      %v690 = vunpack.c.l.b16 %v658
      %v691 = vunpack.c.l.b16 %v659
      %v692 = vunpack.c.l.b16 %v660
      %v693 = vunpack.c.l.b16 %v661
      %v694 = vunpack.c.l.b16 %v662
      %v695 = vunpack.c.l.b16 %v663
      %v696 = vunpack.c.l.b16 %v664
      %v697 = vunpack.c.l.b16 %v665
      %v698 = vpack.c.b16 %v683, %v682
      %v699 = vpack.c.b16 %v685, %v684
      %v700 = vpack.c.b16 %v687, %v686
      %v701 = vpack.c.b16 %v689, %v688
      %v702 = vpack.c.b16 %v691, %v690
      %v703 = vpack.c.b16 %v693, %v692
      %v704 = vpack.c.b16 %v695, %v694
      %v705 = vpack.c.b16 %v697, %v696
      %714 = vmatprep.subr.bf16.mxu0 0
      %715 = vmatpush1.bf16.msra.mxu0 %v698
      %716 = vmatprep.subr.bf16.mxu0 0
      %717 = vmatpush1.bf16.msra.mxu0 %v699
      %718 = vmatprep.subr.bf16.mxu0 0
      %719 = vmatpush1.bf16.msra.mxu0 %v700
      %720 = vmatprep.subr.bf16.mxu0 0
      %721 = vmatpush1.bf16.msra.mxu0 %v701
      %722 = vmatprep.subr.bf16.mxu0 0
      %723 = vmatpush1.bf16.msra.mxu0 %v702
      %724 = vmatprep.subr.bf16.mxu0 0
      %725 = vmatpush1.bf16.msra.mxu0 %v703
      %726 = vmatprep.subr.bf16.mxu0 0
      %727 = vmatpush1.bf16.msra.mxu0 %v704
      %728 = vmatprep.subr.bf16.mxu0 0
      %729 = vmatpush1.bf16.msra.mxu0 %v705
      %730 = vmatprep.subr.bf16.mxu0 0
      %731 = vmatpush1.bf16.msra.mxu0 0
      %732 = vmatprep.subr.bf16.mxu0 0
      %733 = vmatpush1.bf16.msra.mxu0 0
      %734 = vmatprep.subr.bf16.mxu0 0
      %735 = vmatpush1.bf16.msra.mxu0 0
      %736 = vmatprep.subr.bf16.mxu0 0
      %737 = vmatpush1.bf16.msra.mxu0 0
      %738 = vmatprep.subr.bf16.mxu0 0
      %739 = vmatpush1.bf16.msra.mxu0 0
      %740 = vmatprep.subr.bf16.mxu0 0
      %741 = vmatpush1.bf16.msra.mxu0 0
      %742 = vmatprep.subr.bf16.mxu0 0
      %743 = vmatpush1.bf16.msra.mxu0 0
      %744 = vmatprep.subr.bf16.mxu0 0
      %745 = vmatpush1.bf16.msra.mxu0 0
      %746 = vmatprep.mubr.bf16.mxu0 0
      %747 = vmatmul.mubr.bf16.gmra.mrb[0].mxu0 %v647
      %v748 = vpop.f32.mrb[0].mxu0
      %v749 = vadd.f32 0.0, %v748
      %v750 = vpop.f32.mrb[0].mxu0
      %v751 = vpop.f32.mrb[0].mxu0
      %v752 = vadd.f32 0.0, %v751
      %v753 = vpop.f32.mrb[0].mxu0
      %754 = vmatprep.mubr.bf16.mxu0 0
      %755 = vmatmul.mubr.bf16.gmra.mrb[0].mxu0 %v648
      %v756 = vpop.f32.mrb[0].mxu0
      %v757 = vadd.f32 0.0, %v756
      %v758 = vpop.f32.mrb[0].mxu0
      %v759 = vpop.f32.mrb[0].mxu0
      %v760 = vadd.f32 0.0, %v759
      %v761 = vpop.f32.mrb[0].mxu0
      %762 = vdwg.mxu0
      %v763 = vadd.f32 %v629, %v749
      %v764 = vadd.f32 %v632, %v752
      %v765 = vadd.f32 %v637, %v757
      %v766 = vadd.f32 %v640, %v760
      %v767 = vld [vmem:[%s380] sm:$0x1]
      %v769 = vlaneseq
      %v770 = vshrl.u32 %v769, 7
      %v771 = vsub.s32 0, %v770
      %v772 = vrot.slane %v767, %v771
      %v774 = vadd.f32 %v763, %v772
      %v775 = vadd.f32 %v764, %v772
      %v776 = vadd.f32 %v765, %v772
      %v777 = vadd.f32 %v766, %v772
      %v778 = vadd.f32 %v774, %v775
      %v779 = vadd.f32 %v778, %v776
      %v780 = vadd.f32 %v779, %v777
      %v781 = vrot.slane %v780, 4
      %v782 = vadd.f32 %v780, %v781
      %v783 = vrot.slane %v782, 2
      %v784 = vadd.f32 %v782, %v783
      %v785 = vrot.slane %v784, 1
      %v786 = vadd.f32 %v784, %v785
      %v787 = vmul.f32 %v774, %v774
      %v788 = vmul.f32 %v775, %v775
      %v789 = vmul.f32 %v776, %v776
      %v790 = vmul.f32 %v777, %v777
      %v791 = vadd.f32 %v787, %v788
      %v792 = vadd.f32 %v791, %v789
      %v793 = vadd.f32 %v792, %v790
      %v794 = vrot.slane %v793, 4
      %v795 = vadd.f32 %v793, %v794
      %v796 = vrot.slane %v795, 2
      %v797 = vadd.f32 %v795, %v796
      %v798 = vrot.slane %v797, 1
      %v799 = vadd.f32 %v797, %v798
      %vm800 = vcmask 1040384
      %v801 = vsel %vm800, %v786, %v799
      %v802 = vld [vmem:[%s8] sm:$0xff]
      %v803 = vld [vmem:[%s8 + $0x8] sm:$0xff]
      %v804 = vld [vmem:[%s8 + $0x10] sm:$0xff]
      %v805 = vld [vmem:[%s8 + $0x18] sm:$0xff]
      %v806 = vld [vmem:[%s8 + $0x20] sm:$0xff]
      %v807 = vld [vmem:[%s8 + $0x28] sm:$0xff]
      %v808 = vld [vmem:[%s8 + $0x30] sm:$0xff]
      %v809 = vld [vmem:[%s8 + $0x38] sm:$0xff]
      %v810 = vld [vmem:[%s8 + $0x40] sm:$0xff]
      %v811 = vld [vmem:[%s8 + $0x48] sm:$0xff]
      %v812 = vld [vmem:[%s8 + $0x50] sm:$0xff]
      %v813 = vld [vmem:[%s8 + $0x58] sm:$0xff]
      %v814 = vld [vmem:[%s8 + $0x60] sm:$0xff]
      %v815 = vld [vmem:[%s8 + $0x68] sm:$0xff]
      %v816 = vld [vmem:[%s8 + $0x70] sm:$0xff]
      %v817 = vld [vmem:[%s8 + $0x78] sm:$0xff]
      %818 = vmatprep.subr.mxu0 0.0
      %819 = vmatpush1.msra.mxu0 %v802
      %820 = vmatprep.subr.mxu0 0.0
      %821 = vmatpush1.msra.mxu0 %v803
      %822 = vmatprep.subr.mxu0 0.0
      %823 = vmatpush1.msra.mxu0 %v804
      %824 = vmatprep.subr.mxu0 0.0
      %825 = vmatpush1.msra.mxu0 %v805
      %826 = vmatprep.subr.mxu0 0.0
      %827 = vmatpush1.msra.mxu0 %v806
      %828 = vmatprep.subr.mxu0 0.0
      %829 = vmatpush1.msra.mxu0 %v807
      %830 = vmatprep.subr.mxu0 0.0
      %831 = vmatpush1.msra.mxu0 %v808
      %832 = vmatprep.subr.mxu0 0.0
      %833 = vmatpush1.msra.mxu0 %v809
      %834 = vmatprep.subr.mxu0 0.0
      %835 = vmatpush1.msra.mxu0 %v810
      %836 = vmatprep.subr.mxu0 0.0
      %837 = vmatpush1.msra.mxu0 %v811
      %838 = vmatprep.subr.mxu0 0.0
      %839 = vmatpush1.msra.mxu0 %v812
      %840 = vmatprep.subr.mxu0 0.0
      %841 = vmatpush1.msra.mxu0 %v813
      %842 = vmatprep.subr.mxu0 0.0
      %843 = vmatpush1.msra.mxu0 %v814
      %844 = vmatprep.subr.mxu0 0.0
      %845 = vmatpush1.msra.mxu0 %v815
      %846 = vmatprep.subr.mxu0 0.0
      %847 = vmatpush1.msra.mxu0 %v816
      %848 = vmatprep.subr.mxu0 0.0
      %849 = vmatpush1.msra.mxu0 %v817
      %850 = vmatprep.subr.mxu0 0.0
      %851 = vmatpush1.msra.mxu0 0.0
      %852 = vmatprep.subr.mxu0 0.0
      %853 = vmatpush1.msra.mxu0 0.0
      %854 = vmatprep.subr.mxu0 0.0
      %855 = vmatpush1.msra.mxu0 0.0
      %856 = vmatprep.subr.mxu0 0.0
      %857 = vmatpush1.msra.mxu0 0.0
      %858 = vmatprep.subr.mxu0 0.0
      %859 = vmatpush1.msra.mxu0 0.0
      %860 = vmatprep.subr.mxu0 0.0
      %861 = vmatpush1.msra.mxu0 0.0
      %862 = vmatprep.subr.mxu0 0.0
      %863 = vmatpush1.msra.mxu0 0.0
      %864 = vmatprep.subr.mxu0 0.0
      %865 = vmatpush1.msra.mxu0 0.0
      %866 = vmatprep.subr.mxu0 0.0
      %867 = vmatpush1.msra.mxu0 0.0
      %868 = vmatprep.subr.mxu0 0.0
      %869 = vmatpush1.msra.mxu0 0.0
      %870 = vmatprep.subr.mxu0 0.0
      %871 = vmatpush1.msra.mxu0 0.0
      %872 = vmatprep.subr.mxu0 0.0
      %873 = vmatpush1.msra.mxu0 0.0
      %874 = vmatprep.subr.mxu0 0.0
      %875 = vmatpush1.msra.mxu0 0.0
      %876 = vmatprep.subr.mxu0 0.0
      %877 = vmatpush1.msra.mxu0 0.0
      %878 = vmatprep.subr.mxu0 0.0
      %879 = vmatpush1.msra.mxu0 0.0
      %880 = vmatprep.subr.mxu0 0.0
      %881 = vmatpush1.msra.mxu0 0.0
      %882 = vmatprep.mubr.f32.mxu0 0.0
      %883 = vmatmul.mubr.f32.gmra.mrb[0].mxu0 %v801
      %v884 = vpop.f32.mrb[0].mxu0
      %v885 = vadd.f32 0.0, %v884
      %v886 = vpop.f32.mrb[0].mxu0
      %887 = vdwg.mxu0
      %v888 = vmul.f32 %v885, 0.001953125
      %v889 = vmul.f32 %v888, %v888
      %v891 = vrot.slane %v889, 7
      %v893 = vsub.f32 %v888, %v891
      %v894 = vmax.f32 %v893, 0.0
      %v895 = vld [vmem:[%s383] sm:$0x1]
      %v896 = vadd.f32 %v894, 1e-05
      %v897 = vrsqrt.pop %v896
      %v900 = vunpack.c.l.s4 1966171168
      %v901 = vunpack.c.0.s8 %v900
      %v902 = vlaneseq
      %v903 = vshrl.u32 %v902, 7
      %v904 = vsub.s32 %v901, %v903
      %v905 = vrot.slane %v897, %v904
      %v906 = vcombine.high %v905, %v905
      %v908 = vunpack.c.l.s4 1966171168
      %v909 = vunpack.c.0.s8 %v908
      %v910 = vlaneseq
      %v911 = vshrl.u32 %v910, 7
      %v912 = vsub.s32 %v909, %v911
      %v913 = vrot.slane %v906, %v912
      %v915 = vmul.f32 %v895, %v913
      %v916 = vld [vmem:[%s386] sm:$0x1]
      %v917 = vmul.f32 %v888, %v915
      %v918 = vsub.f32 %v916, %v917
      %v920 = vlaneseq
      %v921 = vshrl.u32 %v920, 7
      %v922 = vsub.s32 0, %v921
      %v923 = vrot.slane %v918, %v922
      %v925 = vsel %vm800, %v915, %v923
      %v926 = vld [vmem:[%s9] sm:$0xff]
      %vm927 = vcmask 64512
      %v929 = vsel %vm927, %v925, 0
      %931 = vmatprep.subr.mxu0 0.0
      %932 = vmatpush1.msra.mxu0 %v926
      %933 = vmatprep.subr.mxu0 0.0
      %934 = vmatpush1.msra.mxu0 0.0
      %935 = vmatprep.subr.mxu0 0.0
      %936 = vmatpush1.msra.mxu0 0.0
      %937 = vmatprep.subr.mxu0 0.0
      %938 = vmatpush1.msra.mxu0 0.0
      %939 = vmatprep.subr.mxu0 0.0
      %940 = vmatpush1.msra.mxu0 0.0
      %941 = vmatprep.subr.mxu0 0.0
      %942 = vmatpush1.msra.mxu0 0.0
      %943 = vmatprep.subr.mxu0 0.0
      %944 = vmatpush1.msra.mxu0 0.0
      %945 = vmatprep.subr.mxu0 0.0
      %946 = vmatpush1.msra.mxu0 0.0
      %947 = vmatprep.subr.mxu0 0.0
      %948 = vmatpush1.msra.mxu0 0.0
      %949 = vmatprep.subr.mxu0 0.0
      %950 = vmatpush1.msra.mxu0 0.0
      %951 = vmatprep.subr.mxu0 0.0
      %952 = vmatpush1.msra.mxu0 0.0
      %953 = vmatprep.subr.mxu0 0.0
      %954 = vmatpush1.msra.mxu0 0.0
      %955 = vmatprep.subr.mxu0 0.0
      %956 = vmatpush1.msra.mxu0 0.0
      %957 = vmatprep.subr.mxu0 0.0
      %958 = vmatpush1.msra.mxu0 0.0
      %959 = vmatprep.subr.mxu0 0.0
      %960 = vmatpush1.msra.mxu0 0.0
      %961 = vmatprep.subr.mxu0 0.0
      %962 = vmatpush1.msra.mxu0 0.0
      %963 = vmatprep.subr.mxu0 0.0
      %964 = vmatpush1.msra.mxu0 0.0
      %965 = vmatprep.subr.mxu0 0.0
      %966 = vmatpush1.msra.mxu0 0.0
      %967 = vmatprep.subr.mxu0 0.0
      %968 = vmatpush1.msra.mxu0 0.0
      %969 = vmatprep.subr.mxu0 0.0
      %970 = vmatpush1.msra.mxu0 0.0
      %971 = vmatprep.subr.mxu0 0.0
      %972 = vmatpush1.msra.mxu0 0.0
      %973 = vmatprep.subr.mxu0 0.0
      %974 = vmatpush1.msra.mxu0 0.0
      %975 = vmatprep.subr.mxu0 0.0
      %976 = vmatpush1.msra.mxu0 0.0
      %977 = vmatprep.subr.mxu0 0.0
      %978 = vmatpush1.msra.mxu0 0.0
      %979 = vmatprep.subr.mxu0 0.0
      %980 = vmatpush1.msra.mxu0 0.0
      %981 = vmatprep.subr.mxu0 0.0
      %982 = vmatpush1.msra.mxu0 0.0
      %983 = vmatprep.subr.mxu0 0.0
      %984 = vmatpush1.msra.mxu0 0.0
      %985 = vmatprep.subr.mxu0 0.0
      %986 = vmatpush1.msra.mxu0 0.0
      %987 = vmatprep.subr.mxu0 0.0
      %988 = vmatpush1.msra.mxu0 0.0
      %989 = vmatprep.subr.mxu0 0.0
      %990 = vmatpush1.msra.mxu0 0.0
      %991 = vmatprep.subr.mxu0 0.0
      %992 = vmatpush1.msra.mxu0 0.0
      %993 = vmatprep.subr.mxu0 0.0
      %994 = vmatpush1.msra.mxu0 0.0
      %995 = vmatprep.mubr.f32.mxu0 0.0
      %996 = vmatmul.mubr.f32.gmra.mrb[0].mxu0 %v929
      %v997 = vpop.f32.mrb[0].mxu0
      %v998 = vadd.f32 0.0, %v997
      %v999 = vpop.f32.mrb[0].mxu0
      %1000 = vdwg.mxu0
      %v1001 = vlaneseq
      %v1002 = vshrl.u32 %v1001, 7
      %v1003 = vsub.s32 0, %v1002
      %v1004 = vrot.slane %v998, %v1003
      %v1005 = vmul.f32 %v774, %v1004
      %v1006 = vmul.f32 %v775, %v1004
      %v1007 = vmul.f32 %v776, %v1004
      %v1008 = vmul.f32 %v777, %v1004
      %v1009 = vlaneseq
      %v1010 = vshrl.u32 %v1009, 7
      %v1011 = vsub.s32 1, %v1010
      %v1012 = vrot.slane %v998, %v1011
      %v1013 = vadd.f32 %v1005, %v1012
      %v1014 = vadd.f32 %v1006, %v1012
      %v1015 = vadd.f32 %v1007, %v1012
      %v1016 = vadd.f32 %v1008, %v1012
      %v1017 = vmax.f32 %v1013, 0.0
      %v1018 = vmax.f32 %v1014, 0.0
      %v1019 = vmax.f32 %v1015, 0.0
      %v1020 = vmax.f32 %v1016, 0.0
      %v1021 = vld [vmem:[%s5] sm:$0x3]
      %v1022 = vpack.c.bf16 %v1021, %v1021
      %v1023 = vld [vmem:[%s6] sm:$0x7]
      %v1024 = vld [vmem:[%s7] sm:$0x1]
      %v1026 = vlaneseq
      %v1027 = vshrl.u32 %v1026, 7
      %v1028 = vsub.s32 0, %v1027
      %v1029 = vrot.slane %v1024, %v1028
      %vm1031 = vcmask 48128
      %v1033 = vsel %vm1031, %v1022, 0
      %vm1035 = vcmask 1042432
      %v1037 = vsel %vm1035, %v1023, 0
      %1039 = vmatprep.subr.bf16.mxu0 0
      %1040 = vmatpush1.bf16.msra.mxu0 %v1037
      %1041 = vmatprep.subr.bf16.mxu0 0
      %1042 = vmatpush1.bf16.msra.mxu0 0
      %1043 = vmatprep.subr.bf16.mxu0 0
      %1044 = vmatpush1.bf16.msra.mxu0 0
      %1045 = vmatprep.subr.bf16.mxu0 0
      %1046 = vmatpush1.bf16.msra.mxu0 0
      %1047 = vmatprep.subr.bf16.mxu0 0
      %1048 = vmatpush1.bf16.msra.mxu0 0
      %1049 = vmatprep.subr.bf16.mxu0 0
      %1050 = vmatpush1.bf16.msra.mxu0 0
      %1051 = vmatprep.subr.bf16.mxu0 0
      %1052 = vmatpush1.bf16.msra.mxu0 0
      %1053 = vmatprep.subr.bf16.mxu0 0
      %1054 = vmatpush1.bf16.msra.mxu0 0
      %1055 = vmatprep.subr.bf16.mxu0 0
      %1056 = vmatpush1.bf16.msra.mxu0 0
      %1057 = vmatprep.subr.bf16.mxu0 0
      %1058 = vmatpush1.bf16.msra.mxu0 0
      %1059 = vmatprep.subr.bf16.mxu0 0
      %1060 = vmatpush1.bf16.msra.mxu0 0
      %1061 = vmatprep.subr.bf16.mxu0 0
      %1062 = vmatpush1.bf16.msra.mxu0 0
      %1063 = vmatprep.subr.bf16.mxu0 0
      %1064 = vmatpush1.bf16.msra.mxu0 0
      %1065 = vmatprep.subr.bf16.mxu0 0
      %1066 = vmatpush1.bf16.msra.mxu0 0
      %1067 = vmatprep.subr.bf16.mxu0 0
      %1068 = vmatpush1.bf16.msra.mxu0 0
      %1069 = vmatprep.subr.bf16.mxu0 0
      %1070 = vmatpush1.bf16.msra.mxu0 0
      %1071 = vmatprep.mubr.bf16.mxu0 0
      %1072 = vmatmul.mubr.bf16.gmra.mrb[0].mxu0 %v1033
      %v1073 = vpop.f32.mrb[0].mxu0
      %v1074 = vadd.f32 %v1029, %v1073
      %v1075 = vpop.f32.mrb[0].mxu0
      %v1076 = vpop.f32.mrb[0].mxu0
      %v1077 = vpop.f32.mrb[0].mxu0
      %1078 = vdwg.mxu0
      %s1079 = scalar_select %p388, 1.0, 0.0
      %v1082 = vunpack.c.l.s4 1966171168
      %v1083 = vunpack.c.0.s8 %v1082
      %v1084 = vlaneseq
      %v1085 = vshrl.u32 %v1084, 7
      %v1086 = vsub.s32 %v1083, %v1085
      %v1087 = vrot.slane %v1074, %v1086
      %v1088 = vcombine.high %v1087, %v1087
      %v1090 = vunpack.c.l.s4 1966171168
      %v1091 = vunpack.c.0.s8 %v1090
      %v1092 = vlaneseq
      %v1093 = vshrl.u32 %v1092, 7
      %v1094 = vsub.s32 %v1091, %v1093
      %v1095 = vrot.slane %v1087, %v1094
      %v1097 = vunpack.c.l.s4 1966171168
      %v1098 = vunpack.c.0.s8 %v1097
      %v1099 = vlaneseq
      %v1100 = vshrl.u32 %v1099, 7
      %v1101 = vsub.s32 %v1098, %v1100
      %v1102 = vrot.slane %v1088, %v1101
      %v1105 = vstv %s1079
      %v1106 = vmul.f32 %v1105, %v1095
      %v1107 = vmul.f32 %v1105, %v1102
      %v1110 = vlaneseq
      %v1111 = vshrl.u32 %v1110, 7
      %v1112 = vsub.s32 0, %v1111
      %v1113 = vrot.slane %v1106, %v1112
      %v1114 = vlaneseq
      %v1115 = vshrl.u32 %v1114, 7
      %v1116 = vsub.s32 0, %v1115
      %v1117 = vrot.slane %v1107, %v1116
      %v1120 = vadd.f32 %v1017, %v1113
      %v1121 = vadd.f32 %v1018, %v1113
      %v1122 = vadd.f32 %v1019, %v1117
      %v1123 = vadd.f32 %v1020, %v1117
      %s1124 = sadd.s32 %s21, 1
      %p1125 = scmp.lt.s32.totalorder %s1124, 2
      // Predicated region
      $region65: #{conv_block_forward.1} parent=59 // pred_check
        %p1126 = pneg %p1125
      $region66: #{conv_block_forward.1} parent=59 // pred_check_branch
        %1128 = sbr.rel (%p1126) target = $region68
      $region67: #{conv_block_forward.1} parent=59 // pred_region
        %1129 = vst [vmem:[#allocation2 + $0x8] sm:$0xff] %v1120
        %1130 = vst [vmem:[#allocation2 + $0x10] sm:$0xff] %v1121
        %1131 = vst [vmem:[#allocation2 + $0x28] sm:$0xff] %v1122
        %1132 = vst [vmem:[#allocation2 + $0x30] sm:$0xff] %v1123
      $region68: #{conv_block_forward.1} parent=59 // pred_fallthru
        _
      %p1133 = scmp.eq.s32.totalorder %s1124, 2
      // Predicated region
      $region69: #{conv_block_forward.1} parent=59 // pred_check
        %p1134 = pneg %p1133
      $region70: #{conv_block_forward.1} parent=59 // pred_check_branch
        %1136 = sbr.rel (%p1134) target = $region72
      $region71: #{conv_block_forward.1} parent=59 // pred_region
        %1137 = vst [vmem:[%s10] sm:$0xff] %v1120
        %1138 = vst [vmem:[%s10 + $0x8] sm:$0xff] %v1121
        %1139 = vst [vmem:[%s10 + $0x10] sm:$0xff] %v1122
        %1140 = vst [vmem:[%s10 + $0x18] sm:$0xff] %v1123
      $region72: #{conv_block_forward.1} parent=59 // pred_fallthru
        _
      // Predicated region
      $region73: #{conv_block_forward.1} parent=59 // pred_check
        %p1141 = pneg %p264
      $region74: #{conv_block_forward.1} parent=59 // pred_check_branch
        %1143 = sbr.rel (%p1141) target = $region76
      $region75: #{conv_block_forward.1} parent=59 // pred_region
        _
      $region76: #{conv_block_forward.1} parent=59 // pred_fallthru
        _
      // Predicated region
      $region77: #{conv_block_forward.1} parent=59 // pred_check
        %p1144 = pneg %p264
      $region78: #{conv_block_forward.1} parent=59 // pred_check_branch
        %1146 = sbr.rel (%p1144) target = $region80
      $region79: #{conv_block_forward.1} parent=59 // pred_region
        _
      $region80: #{conv_block_forward.1} parent=59 // pred_fallthru
        _
    $region60: #{conv_block_forward.1} parent=5 // pred_fallthru
      _
    %p1147 = scmp.le.s32.totalorder 2, %s16
    // Predicated region
    $region81: #{conv_block_forward.1} parent=5 // pred_check
      %p1148 = pneg %p1147
    $region82: #{conv_block_forward.1} parent=5 // pred_check_branch
      %1150 = sbr.rel (%p1148) target = $region84
    $region83: #{conv_block_forward.1} parent=5 // pred_region
      %s1151 = ssub.s32 %s16, 2
    $region84: #{conv_block_forward.1} parent=5 // pred_fallthru
      _
  $region6: #{conv_block_forward.1} parent=0 // loop_footer
    %s20 = sadd.s32 1, %s16
  $region7: #{conv_block_forward.1} parent=0 // loop_footer_branch
    %15 = sbr.rel target = $region3
  $region8: #{conv_block_forward.1} parent=0 // loop_exit
    _

</llo_original>
